<compile_context>
chip_gen: v5e
topology: v5e:2x2
jax: 0.10.0
libtpu: 0.0.40
codegen_flags: <defaults>
</compile_context>

<pallas_src>
import functools
import math

import jax
import jax.numpy as jnp
from jax import lax
from jax.experimental import pallas as pl
from jax.experimental.pallas import tpu as pltpu

# ----------------- synthetic config (mirrors tts config fields) -----------------
ENCODER_INPUT_SIZE = 32          # config.encoder_input_size == config.fft_emb
FFT_EMB            = 32          # model width D
ATT_HEADS          = 4           # config.att_heads
HEAD_DIM            = FFT_EMB // ATT_HEADS
CONV1_IN           = 32          # config.conv1_input_size
CONV1_OUT          = 64          # config.conv1_output_size
CONV2_IN           = 64          # config.conv2_input_size
CONV2_OUT          = 32          # config.conv2_output_size
CONV_KERNEL        = 3           # config.conv_kernel
DECODER_LAYERS     = 2           # config.decoder_layers
LN_EPS             = 1e-5

B_EX, T_EX = 2, 8                # small example shapes


# ------------------------------- kernel helpers --------------------------------
def _layer_norm(y, gamma, beta):
    mu = jnp.mean(y, axis=-1, keepdims=True)
    var = jnp.mean(jnp.square(y - mu), axis=-1, keepdims=True)
    return (y - mu) * lax.rsqrt(var + LN_EPS) * gamma + beta


# ------------------------------- fused Pallas kernel ---------------------------
def decoder_kernel(x_ref, pe_ref,
                   wqkv_ref, bqkv_ref, wo_ref, bo_ref, lna_g_ref, lna_b_ref,
                   w1_ref, b1_ref, w2_ref, b2_ref, lnc_g_ref, lnc_b_ref,
                   o_ref, *, n_heads):
    T, D = x_ref.shape                              # one batch element per grid step
    n_layers = wqkv_ref.shape[0]
    hd = D // n_heads
    scale = 1.0 / math.sqrt(hd)

    # conv zero-padding masks at the sequence edges (hoisted out of the layer loop)
    t_idx = lax.broadcasted_iota(jnp.int32, (T, 1), 0)
    is_first = t_idx == 0                           # [T, 1]
    is_last = t_idx == T - 1                        # [T, 1]

    # ---- positional encoding (dropout = inference no-op) ----
    x = x_ref[...] + pe_ref[...]                    # [T, D]

    for l in range(n_layers):                       # static unroll, L = 2
        # -------------------- multi-head self-attention --------------------
        # fused Q/K/V projection: one lane-dense [T, D] x [D, 3D] matmul
        qkv = jnp.dot(x, wqkv_ref[l],
                      preferred_element_type=jnp.float32) + bqkv_ref[l]   # [T, 3D]

        ctx_heads = []
        for h in range(n_heads):                    # static unroll, H = 4
            qh = qkv[:, h * hd:(h + 1) * hd]                  # [T, hd] lane slices
            kh = qkv[:, D + h * hd:D + (h + 1) * hd]
            vh = qkv[:, 2 * D + h * hd:2 * D + (h + 1) * hd]
            # per-batch [T, T] scores — no cross-batch bias needed
            s = jnp.einsum("tc,sc->ts", qh, kh,
                           preferred_element_type=jnp.float32) * scale
            s = s - jnp.max(s, axis=-1, keepdims=True)
            p = jnp.exp(s)
            p = p * pl.reciprocal(jnp.sum(p, axis=-1, keepdims=True), approx=True)
            ctx_heads.append(jnp.dot(p, vh, preferred_element_type=jnp.float32))

        ctx = jnp.concatenate(ctx_heads, axis=-1)             # [T, D] (head-concat)
        att_out = jnp.dot(ctx, wo_ref[l],
                          preferred_element_type=jnp.float32) + bo_ref[l]
        x = _layer_norm(att_out + x, lna_g_ref[l], lna_b_ref[l])

        # -------------------- position-wise conv net --------------------
        # conv1: kernel=3, padding=1 as im2col (roll + edge masks + lane concat)
        prev = jnp.where(is_first, 0.0, pltpu.roll(x, shift=1, axis=0))
        nxt = jnp.where(is_last, 0.0, pltpu.roll(x, shift=T - 1, axis=0))
        xc = jnp.concatenate([prev, x, nxt], axis=-1)          # [T, 3*D]
        h1 = jnp.dot(xc, w1_ref[l],
                     preferred_element_type=jnp.float32) + b1_ref[l]
        h1 = jnp.maximum(h1, 0.0)                              # ReLU

        # conv2 (dropout = inference no-op)
        prev_h = jnp.where(is_first, 0.0, pltpu.roll(h1, shift=1, axis=0))
        nxt_h = jnp.where(is_last, 0.0, pltpu.roll(h1, shift=T - 1, axis=0))
        hc = jnp.concatenate([prev_h, h1, nxt_h], axis=-1)     # [T, 3*C1]
        conv_out = jnp.dot(hc, w2_ref[l],
                           preferred_element_type=jnp.float32) + b2_ref[l]

        x = _layer_norm(conv_out + x, lnc_g_ref[l], lnc_b_ref[l])

    o_ref[...] = x


# ------------------------------- wrapper / glue ---------------------------------
def pack_params(layers):
    """Stack per-layer params along a leading L axis.  Q/K/V weights are fused to
    [D, 3D]; conv tap weights are im2col-flattened to [3*C_in, C_out]."""

    def stack(get):
        return jnp.stack([get(lyr) for lyr in layers])

    return [
        stack(lambda l: jnp.concatenate(
            [l["att"]["wq"], l["att"]["wk"], l["att"]["wv"]], axis=1)),   # [L, D, 3D]
        stack(lambda l: jnp.concatenate(
            [l["att"]["bq"], l["att"]["bk"], l["att"]["bv"]], axis=1)),   # [L, 1, 3D]
        stack(lambda l: l["att"]["wo"]),                                  # [L, D, D]
        stack(lambda l: l["att"]["bo"]),
        stack(lambda l: l["att"]["ln_g"]), stack(lambda l: l["att"]["ln_b"]),
        stack(lambda l: l["conv"]["w1"].reshape(CONV_KERNEL * CONV1_IN, CONV1_OUT)),
        stack(lambda l: l["conv"]["b1"]),
        stack(lambda l: l["conv"]["w2"].reshape(CONV_KERNEL * CONV2_IN, CONV2_OUT)),
        stack(lambda l: l["conv"]["b2"]),
        stack(lambda l: l["conv"]["ln_g"]), stack(lambda l: l["conv"]["ln_b"]),
    ]


def decoder_forward(x, pe, layers):
    B, T, D = x.shape
    params = pack_params(layers)
    inputs = [x, pe[:T]] + params

    # weights: full array resident (constant block across the batch grid)
    def weight_spec(a):
        nd = a.ndim
        return pl.BlockSpec(a.shape, lambda b, _nd=nd: (0,) * _nd)

    in_specs = ([pl.BlockSpec((None, T, D), lambda b: (b, 0, 0)),   # x: one batch slab
                 pl.BlockSpec((T, D), lambda b: (0, 0))]            # PE shared by all b
                + [weight_spec(a) for a in params])
    out_spec = pl.BlockSpec((None, T, D), lambda b: (b, 0, 0))

    # advisory cost estimate (per-batch attention, no cross-batch waste)
    L, H, C1, C2, K = len(layers), ATT_HEADS, CONV1_OUT, CONV2_OUT, CONV_KERNEL
    flops = L * B * (2 * T * D * 3 * D           # fused QKV projection
                     + 2 * T * T * D * 2         # scores + context (all heads)
                     + 2 * T * D * D             # output projection
                     + 2 * T * K * D * C1        # conv1 (im2col)
                     + 2 * T * K * C1 * C2)      # conv2 (im2col)
    transcendentals = L * B * (H * T * T + H * T + 4 * T)
    bytes_accessed = (sum(int(a.size) * a.dtype.itemsize for a in inputs)
                      + B * T * D * 4)

    return pl.pallas_call(
        functools.partial(decoder_kernel, n_heads=ATT_HEADS),
        grid=(B,),
        out_shape=jax.ShapeDtypeStruct((B, T, D), jnp.float32),
        in_specs=in_specs,
        out_specs=out_spec,
        compiler_params=pltpu.CompilerParams(dimension_semantics=("parallel",)),
        cost_estimate=pl.CostEstimate(flops=flops,
                                      transcendentals=transcendentals,
                                      bytes_accessed=bytes_accessed),
    )(*inputs)


# ---------------------------------- params / main --------------------------------
def make_pe_table(seq_len, d_model):
    position = jnp.arange(seq_len, dtype=jnp.float32)[:, None]
    div_term = jnp.exp(jnp.arange(0, d_model, 2, dtype=jnp.float32)
                       * (-math.log(10000.0) / d_model))
    pe = jnp.zeros((seq_len, d_model), jnp.float32)
    pe = pe.at[:, 0::2].set(jnp.sin(position * div_term))
    pe = pe.at[:, 1::2].set(jnp.cos(position * div_term))
    return pe


def init_layer(key):
    ks = jax.random.split(key, 6)
    s = 0.08
    D = FFT_EMB
    att = dict(
        wq=s * jax.random.normal(ks[0], (D, D), jnp.float32),
        bq=jnp.zeros((1, D), jnp.float32),
        wk=s * jax.random.normal(ks[1], (D, D), jnp.float32),
        bk=jnp.zeros((1, D), jnp.float32),
        wv=s * jax.random.normal(ks[2], (D, D), jnp.float32),
        bv=jnp.zeros((1, D), jnp.float32),
        wo=s * jax.random.normal(ks[3], (D, D), jnp.float32),
        bo=jnp.zeros((1, D), jnp.float32),
        ln_g=jnp.ones((1, D), jnp.float32),
        ln_b=jnp.zeros((1, D), jnp.float32),
    )
    conv = dict(
        # w1[k, c_in, c_out] == torch_conv1.weight[c_out, c_in, k]; k=0 is the
        # "previous timestep" tap (padding = kernel//2).
        w1=s * jax.random.normal(ks[4], (CONV_KERNEL, CONV1_IN, CONV1_OUT), jnp.float32),
        b1=jnp.zeros((1, CONV1_OUT), jnp.float32),
        w2=s * jax.random.normal(ks[5], (CONV_KERNEL, CONV2_IN, CONV2_OUT), jnp.float32),
        b2=jnp.zeros((1, CONV2_OUT), jnp.float32),
        ln_g=jnp.ones((1, CONV2_OUT), jnp.float32),
        ln_b=jnp.zeros((1, CONV2_OUT), jnp.float32),
    )
    return dict(att=att, conv=conv)


if __name__ == "__main__":
    key = jax.random.PRNGKey(0)
    key, xk = jax.random.split(key)
    x = jax.random.normal(xk, (B_EX, T_EX, ENCODER_INPUT_SIZE), jnp.float32)

    pe = make_pe_table(T_EX, ENCODER_INPUT_SIZE)
    layer_keys = jax.random.split(key, DECODER_LAYERS)
    layers = [init_layer(k) for k in layer_keys]

    fwd = jax.jit(decoder_forward)
    out = jax.block_until_ready(fwd(x, pe, layers))
    assert out.shape == (B_EX, T_EX, FFT_EMB)
    assert bool(jnp.all(jnp.isfinite(out)))
    print("KERNEL_OK")
</pallas_src>

<mosaic_0001>
module attributes {stable_mosaic.version = 11 : i64} {
  func.func @decoder_kernel(%arg0: i32, %arg1: memref<1x8x32xf32, #tpu.memory_space<vmem>>, %arg2: memref<8x32xf32, #tpu.memory_space<vmem>>, %arg3: memref<2x32x96xf32, #tpu.memory_space<vmem>>, %arg4: memref<2x1x96xf32, #tpu.memory_space<vmem>>, %arg5: memref<2x32x32xf32, #tpu.memory_space<vmem>>, %arg6: memref<2x1x32xf32, #tpu.memory_space<vmem>>, %arg7: memref<2x1x32xf32, #tpu.memory_space<vmem>>, %arg8: memref<2x1x32xf32, #tpu.memory_space<vmem>>, %arg9: memref<2x96x64xf32, #tpu.memory_space<vmem>>, %arg10: memref<2x1x64xf32, #tpu.memory_space<vmem>>, %arg11: memref<2x192x32xf32, #tpu.memory_space<vmem>>, %arg12: memref<2x1x32xf32, #tpu.memory_space<vmem>>, %arg13: memref<2x1x32xf32, #tpu.memory_space<vmem>>, %arg14: memref<2x1x32xf32, #tpu.memory_space<vmem>>, %arg15: memref<1x8x32xf32, #tpu.memory_space<vmem>>) attributes {dimension_semantics = [#tpu.dimension_semantics<parallel>], iteration_bounds = array<i64: 2>, scalar_prefetch = 0 : i64, scratch_operands = 0 : i64, tpu.core_type = #tpu.core_type<tc>, window_params = [{transform_indices = @transform_0, window_bounds = array<i64: 1, 8, 32>}, {pipeline_mode = #tpu.pipeline_mode<synchronous>, transform_indices = @transform_1, window_bounds = array<i64: 8, 32>}, {pipeline_mode = #tpu.pipeline_mode<synchronous>, transform_indices = @transform_2, window_bounds = array<i64: 2, 32, 96>}, {pipeline_mode = #tpu.pipeline_mode<synchronous>, transform_indices = @transform_3, window_bounds = array<i64: 2, 1, 96>}, {pipeline_mode = #tpu.pipeline_mode<synchronous>, transform_indices = @transform_4, window_bounds = array<i64: 2, 32, 32>}, {pipeline_mode = #tpu.pipeline_mode<synchronous>, transform_indices = @transform_5, window_bounds = array<i64: 2, 1, 32>}, {pipeline_mode = #tpu.pipeline_mode<synchronous>, transform_indices = @transform_6, window_bounds = array<i64: 2, 1, 32>}, {pipeline_mode = #tpu.pipeline_mode<synchronous>, transform_indices = @transform_7, window_bounds = array<i64: 2, 1, 32>}, {pipeline_mode = #tpu.pipeline_mode<synchronous>, transform_indices = @transform_8, window_bounds = array<i64: 2, 96, 64>}, {pipeline_mode = #tpu.pipeline_mode<synchronous>, transform_indices = @transform_9, window_bounds = array<i64: 2, 1, 64>}, {pipeline_mode = #tpu.pipeline_mode<synchronous>, transform_indices = @transform_10, window_bounds = array<i64: 2, 192, 32>}, {pipeline_mode = #tpu.pipeline_mode<synchronous>, transform_indices = @transform_11, window_bounds = array<i64: 2, 1, 32>}, {pipeline_mode = #tpu.pipeline_mode<synchronous>, transform_indices = @transform_12, window_bounds = array<i64: 2, 1, 32>}, {pipeline_mode = #tpu.pipeline_mode<synchronous>, transform_indices = @transform_13, window_bounds = array<i64: 2, 1, 32>}, {transform_indices = @transform_14, window_bounds = array<i64: 1, 8, 32>}]} {
    %0 = tpu.iota {dimensions = array<i32: 0>} : vector<8x1xi32>
    %c0_i32 = arith.constant 0 : i32
    %1 = vector.broadcast %c0_i32 : i32 to vector<8x1xi32>
    %2 = arith.cmpi eq, %0, %1 : vector<8x1xi32>
    %c7_i32 = arith.constant 7 : i32
    %3 = vector.broadcast %c7_i32 : i32 to vector<8x1xi32>
    %4 = arith.cmpi eq, %0, %3 : vector<8x1xi32>
    %c0 = arith.constant 0 : index
    %c0_0 = arith.constant 0 : index
    %c0_1 = arith.constant 0 : index
    %5 = vector.load %arg1[%c0, %c0_0, %c0_1] : memref<1x8x32xf32, #tpu.memory_space<vmem>>, vector<1x8x32xf32>
    %6 = vector.shape_cast %5 : vector<1x8x32xf32> to vector<8x32xf32>
    %c0_2 = arith.constant 0 : index
    %c0_3 = arith.constant 0 : index
    %7 = vector.load %arg2[%c0_2, %c0_3] : memref<8x32xf32, #tpu.memory_space<vmem>>, vector<8x32xf32>
    %8 = arith.addf %6, %7 : vector<8x32xf32>
    %c0_4 = arith.constant 0 : index
    %c0_5 = arith.constant 0 : index
    %c0_6 = arith.constant 0 : index
    %9 = vector.load %arg3[%c0_4, %c0_5, %c0_6] : memref<2x32x96xf32, #tpu.memory_space<vmem>>, vector<1x32x96xf32>
    %10 = vector.shape_cast %9 : vector<1x32x96xf32> to vector<32x96xf32>
    %cst = arith.constant dense<0.000000e+00> : vector<8x96xf32>
    %11 = tpu.matmul %8, %10, %cst {dimension_numbers = #tpu.dot_dimension_numbers<[1], [0], [0], [1], [0, 0, 1, 1], [], []>} : vector<8x32xf32>, vector<32x96xf32>, vector<8x96xf32> -> vector<8x96xf32>
    %c0_7 = arith.constant 0 : index
    %c0_8 = arith.constant 0 : index
    %c0_9 = arith.constant 0 : index
    %12 = vector.load %arg4[%c0_7, %c0_8, %c0_9] : memref<2x1x96xf32, #tpu.memory_space<vmem>>, vector<1x1x96xf32>
    %13 = vector.shape_cast %12 : vector<1x1x96xf32> to vector<1x96xf32>
    %14 = vector.broadcast %13 : vector<1x96xf32> to vector<8x96xf32>
    %15 = arith.addf %11, %14 : vector<8x96xf32>
    %16 = vector.extract_strided_slice %15 {offsets = [0, 0], sizes = [8, 8], strides = [1, 1]} : vector<8x96xf32> to vector<8x8xf32>
    %17 = vector.extract_strided_slice %15 {offsets = [0, 32], sizes = [8, 8], strides = [1, 1]} : vector<8x96xf32> to vector<8x8xf32>
    %18 = vector.extract_strided_slice %15 {offsets = [0, 64], sizes = [8, 8], strides = [1, 1]} : vector<8x96xf32> to vector<8x8xf32>
    "tpu.trace_start"() <{level = 10 : i32, message = "tc,sc->ts"}> : () -> ()
    %cst_10 = arith.constant dense<0.000000e+00> : vector<8x8xf32>
    %19 = tpu.matmul %16, %17, %cst_10 {dimension_numbers = #tpu.dot_dimension_numbers<[1], [1], [0], [0], [0, 0, 1, 0], [], []>} : vector<8x8xf32>, vector<8x8xf32>, vector<8x8xf32> -> vector<8x8xf32>
    "tpu.trace_stop"() : () -> ()
    %cst_11 = arith.constant 0.353553385 : f32
    %20 = vector.broadcast %cst_11 : f32 to vector<8x8xf32>
    %21 = arith.mulf %19, %20 : vector<8x8xf32>
    %cst_12 = arith.constant dense<0xFF800000> : vector<8xf32>
    %22 = vector.multi_reduction <maximumf>, %21, %cst_12 [1] : vector<8x8xf32> to vector<8xf32>
    %23 = vector.shape_cast %22 : vector<8xf32> to vector<8x1xf32>
    %24 = vector.broadcast %23 : vector<8x1xf32> to vector<8x8xf32>
    %25 = arith.subf %21, %24 : vector<8x8xf32>
    %26 = math.exp %25 : vector<8x8xf32>
    %cst_13 = arith.constant dense<0.000000e+00> : vector<8xf32>
    %27 = vector.multi_reduction <add>, %26, %cst_13 [1] : vector<8x8xf32> to vector<8xf32>
    %28 = vector.shape_cast %27 : vector<8xf32> to vector<8x1xf32>
    %29 = tpu.reciprocal %28 {approx = true} : vector<8x1xf32> -> vector<8x1xf32>
    %30 = vector.broadcast %29 : vector<8x1xf32> to vector<8x8xf32>
    %31 = arith.mulf %26, %30 : vector<8x8xf32>
    %cst_14 = arith.constant dense<0.000000e+00> : vector<8x8xf32>
    %32 = tpu.matmul %31, %18, %cst_14 {dimension_numbers = #tpu.dot_dimension_numbers<[1], [0], [0], [1], [0, 0, 1, 1], [], []>} : vector<8x8xf32>, vector<8x8xf32>, vector<8x8xf32> -> vector<8x8xf32>
    %33 = vector.extract_strided_slice %15 {offsets = [0, 8], sizes = [8, 8], strides = [1, 1]} : vector<8x96xf32> to vector<8x8xf32>
    %34 = vector.extract_strided_slice %15 {offsets = [0, 40], sizes = [8, 8], strides = [1, 1]} : vector<8x96xf32> to vector<8x8xf32>
    %35 = vector.extract_strided_slice %15 {offsets = [0, 72], sizes = [8, 8], strides = [1, 1]} : vector<8x96xf32> to vector<8x8xf32>
    "tpu.trace_start"() <{level = 10 : i32, message = "tc,sc->ts"}> : () -> ()
    %cst_15 = arith.constant dense<0.000000e+00> : vector<8x8xf32>
    %36 = tpu.matmul %33, %34, %cst_15 {dimension_numbers = #tpu.dot_dimension_numbers<[1], [1], [0], [0], [0, 0, 1, 0], [], []>} : vector<8x8xf32>, vector<8x8xf32>, vector<8x8xf32> -> vector<8x8xf32>
    "tpu.trace_stop"() : () -> ()
    %cst_16 = arith.constant 0.353553385 : f32
    %37 = vector.broadcast %cst_16 : f32 to vector<8x8xf32>
    %38 = arith.mulf %36, %37 : vector<8x8xf32>
    %cst_17 = arith.constant dense<0xFF800000> : vector<8xf32>
    %39 = vector.multi_reduction <maximumf>, %38, %cst_17 [1] : vector<8x8xf32> to vector<8xf32>
    %40 = vector.shape_cast %39 : vector<8xf32> to vector<8x1xf32>
    %41 = vector.broadcast %40 : vector<8x1xf32> to vector<8x8xf32>
    %42 = arith.subf %38, %41 : vector<8x8xf32>
    %43 = math.exp %42 : vector<8x8xf32>
    %cst_18 = arith.constant dense<0.000000e+00> : vector<8xf32>
    %44 = vector.multi_reduction <add>, %43, %cst_18 [1] : vector<8x8xf32> to vector<8xf32>
    %45 = vector.shape_cast %44 : vector<8xf32> to vector<8x1xf32>
    %46 = tpu.reciprocal %45 {approx = true} : vector<8x1xf32> -> vector<8x1xf32>
    %47 = vector.broadcast %46 : vector<8x1xf32> to vector<8x8xf32>
    %48 = arith.mulf %43, %47 : vector<8x8xf32>
    %cst_19 = arith.constant dense<0.000000e+00> : vector<8x8xf32>
    %49 = tpu.matmul %48, %35, %cst_19 {dimension_numbers = #tpu.dot_dimension_numbers<[1], [0], [0], [1], [0, 0, 1, 1], [], []>} : vector<8x8xf32>, vector<8x8xf32>, vector<8x8xf32> -> vector<8x8xf32>
    %50 = vector.extract_strided_slice %15 {offsets = [0, 16], sizes = [8, 8], strides = [1, 1]} : vector<8x96xf32> to vector<8x8xf32>
    %51 = vector.extract_strided_slice %15 {offsets = [0, 48], sizes = [8, 8], strides = [1, 1]} : vector<8x96xf32> to vector<8x8xf32>
    %52 = vector.extract_strided_slice %15 {offsets = [0, 80], sizes = [8, 8], strides = [1, 1]} : vector<8x96xf32> to vector<8x8xf32>
    "tpu.trace_start"() <{level = 10 : i32, message = "tc,sc->ts"}> : () -> ()
    %cst_20 = arith.constant dense<0.000000e+00> : vector<8x8xf32>
    %53 = tpu.matmul %50, %51, %cst_20 {dimension_numbers = #tpu.dot_dimension_numbers<[1], [1], [0], [0], [0, 0, 1, 0], [], []>} : vector<8x8xf32>, vector<8x8xf32>, vector<8x8xf32> -> vector<8x8xf32>
    "tpu.trace_stop"() : () -> ()
    %cst_21 = arith.constant 0.353553385 : f32
    %54 = vector.broadcast %cst_21 : f32 to vector<8x8xf32>
    %55 = arith.mulf %53, %54 : vector<8x8xf32>
    %cst_22 = arith.constant dense<0xFF800000> : vector<8xf32>
    %56 = vector.multi_reduction <maximumf>, %55, %cst_22 [1] : vector<8x8xf32> to vector<8xf32>
    %57 = vector.shape_cast %56 : vector<8xf32> to vector<8x1xf32>
    %58 = vector.broadcast %57 : vector<8x1xf32> to vector<8x8xf32>
    %59 = arith.subf %55, %58 : vector<8x8xf32>
    %60 = math.exp %59 : vector<8x8xf32>
    %cst_23 = arith.constant dense<0.000000e+00> : vector<8xf32>
    %61 = vector.multi_reduction <add>, %60, %cst_23 [1] : vector<8x8xf32> to vector<8xf32>
    %62 = vector.shape_cast %61 : vector<8xf32> to vector<8x1xf32>
    %63 = tpu.reciprocal %62 {approx = true} : vector<8x1xf32> -> vector<8x1xf32>
    %64 = vector.broadcast %63 : vector<8x1xf32> to vector<8x8xf32>
    %65 = arith.mulf %60, %64 : vector<8x8xf32>
    %cst_24 = arith.constant dense<0.000000e+00> : vector<8x8xf32>
    %66 = tpu.matmul %65, %52, %cst_24 {dimension_numbers = #tpu.dot_dimension_numbers<[1], [0], [0], [1], [0, 0, 1, 1], [], []>} : vector<8x8xf32>, vector<8x8xf32>, vector<8x8xf32> -> vector<8x8xf32>
    %67 = vector.extract_strided_slice %15 {offsets = [0, 24], sizes = [8, 8], strides = [1, 1]} : vector<8x96xf32> to vector<8x8xf32>
    %68 = vector.extract_strided_slice %15 {offsets = [0, 56], sizes = [8, 8], strides = [1, 1]} : vector<8x96xf32> to vector<8x8xf32>
    %69 = vector.extract_strided_slice %15 {offsets = [0, 88], sizes = [8, 8], strides = [1, 1]} : vector<8x96xf32> to vector<8x8xf32>
    "tpu.trace_start"() <{level = 10 : i32, message = "tc,sc->ts"}> : () -> ()
    %cst_25 = arith.constant dense<0.000000e+00> : vector<8x8xf32>
    %70 = tpu.matmul %67, %68, %cst_25 {dimension_numbers = #tpu.dot_dimension_numbers<[1], [1], [0], [0], [0, 0, 1, 0], [], []>} : vector<8x8xf32>, vector<8x8xf32>, vector<8x8xf32> -> vector<8x8xf32>
    "tpu.trace_stop"() : () -> ()
    %cst_26 = arith.constant 0.353553385 : f32
    %71 = vector.broadcast %cst_26 : f32 to vector<8x8xf32>
    %72 = arith.mulf %70, %71 : vector<8x8xf32>
    %cst_27 = arith.constant dense<0xFF800000> : vector<8xf32>
    %73 = vector.multi_reduction <maximumf>, %72, %cst_27 [1] : vector<8x8xf32> to vector<8xf32>
    %74 = vector.shape_cast %73 : vector<8xf32> to vector<8x1xf32>
    %75 = vector.broadcast %74 : vector<8x1xf32> to vector<8x8xf32>
    %76 = arith.subf %72, %75 : vector<8x8xf32>
    %77 = math.exp %76 : vector<8x8xf32>
    %cst_28 = arith.constant dense<0.000000e+00> : vector<8xf32>
    %78 = vector.multi_reduction <add>, %77, %cst_28 [1] : vector<8x8xf32> to vector<8xf32>
    %79 = vector.shape_cast %78 : vector<8xf32> to vector<8x1xf32>
    %80 = tpu.reciprocal %79 {approx = true} : vector<8x1xf32> -> vector<8x1xf32>
    %81 = vector.broadcast %80 : vector<8x1xf32> to vector<8x8xf32>
    %82 = arith.mulf %77, %81 : vector<8x8xf32>
    %cst_29 = arith.constant dense<0.000000e+00> : vector<8x8xf32>
    %83 = tpu.matmul %82, %69, %cst_29 {dimension_numbers = #tpu.dot_dimension_numbers<[1], [0], [0], [1], [0, 0, 1, 1], [], []>} : vector<8x8xf32>, vector<8x8xf32>, vector<8x8xf32> -> vector<8x8xf32>
    %84 = tpu.concatenate %32, %49, %66, %83 in 1 : vector<8x8xf32>, vector<8x8xf32>, vector<8x8xf32>, vector<8x8xf32> -> vector<8x32xf32>
    %c0_30 = arith.constant 0 : index
    %c0_31 = arith.constant 0 : index
    %c0_32 = arith.constant 0 : index
    %85 = vector.load %arg5[%c0_30, %c0_31, %c0_32] : memref<2x32x32xf32, #tpu.memory_space<vmem>>, vector<1x32x32xf32>
    %86 = vector.shape_cast %85 : vector<1x32x32xf32> to vector<32x32xf32>
    %cst_33 = arith.constant dense<0.000000e+00> : vector<8x32xf32>
    %87 = tpu.matmul %84, %86, %cst_33 {dimension_numbers = #tpu.dot_dimension_numbers<[1], [0], [0], [1], [0, 0, 1, 1], [], []>} : vector<8x32xf32>, vector<32x32xf32>, vector<8x32xf32> -> vector<8x32xf32>
    %c0_34 = arith.constant 0 : index
    %c0_35 = arith.constant 0 : index
    %c0_36 = arith.constant 0 : index
    %88 = vector.load %arg6[%c0_34, %c0_35, %c0_36] : memref<2x1x32xf32, #tpu.memory_space<vmem>>, vector<1x1x32xf32>
    %89 = vector.shape_cast %88 : vector<1x1x32xf32> to vector<1x32xf32>
    %90 = vector.broadcast %89 : vector<1x32xf32> to vector<8x32xf32>
    %91 = arith.addf %87, %90 : vector<8x32xf32>
    %92 = arith.addf %91, %8 : vector<8x32xf32>
    %c0_37 = arith.constant 0 : index
    %c0_38 = arith.constant 0 : index
    %c0_39 = arith.constant 0 : index
    %93 = vector.load %arg7[%c0_37, %c0_38, %c0_39] : memref<2x1x32xf32, #tpu.memory_space<vmem>>, vector<1x1x32xf32>
    %94 = vector.shape_cast %93 : vector<1x1x32xf32> to vector<1x32xf32>
    %c0_40 = arith.constant 0 : index
    %c0_41 = arith.constant 0 : index
    %c0_42 = arith.constant 0 : index
    %95 = vector.load %arg8[%c0_40, %c0_41, %c0_42] : memref<2x1x32xf32, #tpu.memory_space<vmem>>, vector<1x1x32xf32>
    %96 = vector.shape_cast %95 : vector<1x1x32xf32> to vector<1x32xf32>
    %cst_43 = arith.constant dense<0.000000e+00> : vector<8xf32>
    %97 = vector.multi_reduction <add>, %92, %cst_43 [1] : vector<8x32xf32> to vector<8xf32>
    %98 = vector.shape_cast %97 : vector<8xf32> to vector<8x1xf32>
    %cst_44 = arith.constant 3.200000e+01 : f32
    %99 = vector.broadcast %cst_44 : f32 to vector<8x1xf32>
    %100 = arith.divf %98, %99 : vector<8x1xf32>
    %101 = vector.broadcast %100 : vector<8x1xf32> to vector<8x32xf32>
    %102 = arith.subf %92, %101 : vector<8x32xf32>
    %103 = arith.mulf %102, %102 : vector<8x32xf32>
    %cst_45 = arith.constant dense<0.000000e+00> : vector<8xf32>
    %104 = vector.multi_reduction <add>, %103, %cst_45 [1] : vector<8x32xf32> to vector<8xf32>
    %105 = vector.shape_cast %104 : vector<8xf32> to vector<8x1xf32>
    %cst_46 = arith.constant 3.200000e+01 : f32
    %106 = vector.broadcast %cst_46 : f32 to vector<8x1xf32>
    %107 = arith.divf %105, %106 : vector<8x1xf32>
    %108 = vector.broadcast %100 : vector<8x1xf32> to vector<8x32xf32>
    %109 = arith.subf %92, %108 : vector<8x32xf32>
    %cst_47 = arith.constant 9.99999974E-6 : f32
    %110 = vector.broadcast %cst_47 : f32 to vector<8x1xf32>
    %111 = arith.addf %107, %110 : vector<8x1xf32>
    %112 = math.rsqrt %111 : vector<8x1xf32>
    %113 = vector.broadcast %112 : vector<8x1xf32> to vector<8x32xf32>
    %114 = arith.mulf %109, %113 : vector<8x32xf32>
    %115 = vector.broadcast %94 : vector<1x32xf32> to vector<8x32xf32>
    %116 = arith.mulf %114, %115 : vector<8x32xf32>
    %117 = vector.broadcast %96 : vector<1x32xf32> to vector<8x32xf32>
    %118 = arith.addf %116, %117 : vector<8x32xf32>
    %c1_i32 = arith.constant 1 : i32
    %119 = tpu.dynamic_rotate %118 by %c1_i32 dim 0 : vector<8x32xf32>, i32 -> vector<8x32xf32>
    %cst_48 = arith.constant 0.000000e+00 : f32
    %120 = vector.shape_cast %2 : vector<8x1xi1> to vector<8x1xi1>
    %121 = vector.broadcast %120 : vector<8x1xi1> to vector<8x32xi1>
    %122 = vector.broadcast %cst_48 : f32 to vector<8x32xf32>
    %123 = arith.select %121, %122, %119 : vector<8x32xi1>, vector<8x32xf32>
    %c7_i32_49 = arith.constant 7 : i32
    %124 = tpu.dynamic_rotate %118 by %c7_i32_49 dim 0 : vector<8x32xf32>, i32 -> vector<8x32xf32>
    %cst_50 = arith.constant 0.000000e+00 : f32
    %125 = vector.shape_cast %4 : vector<8x1xi1> to vector<8x1xi1>
    %126 = vector.broadcast %125 : vector<8x1xi1> to vector<8x32xi1>
    %127 = vector.broadcast %cst_50 : f32 to vector<8x32xf32>
    %128 = arith.select %126, %127, %124 : vector<8x32xi1>, vector<8x32xf32>
    %129 = tpu.concatenate %123, %118, %128 in 1 : vector<8x32xf32>, vector<8x32xf32>, vector<8x32xf32> -> vector<8x96xf32>
    %c0_51 = arith.constant 0 : index
    %c0_52 = arith.constant 0 : index
    %c0_53 = arith.constant 0 : index
    %130 = vector.load %arg9[%c0_51, %c0_52, %c0_53] : memref<2x96x64xf32, #tpu.memory_space<vmem>>, vector<1x96x64xf32>
    %131 = vector.shape_cast %130 : vector<1x96x64xf32> to vector<96x64xf32>
    %cst_54 = arith.constant dense<0.000000e+00> : vector<8x64xf32>
    %132 = tpu.matmul %129, %131, %cst_54 {dimension_numbers = #tpu.dot_dimension_numbers<[1], [0], [0], [1], [0, 0, 1, 1], [], []>} : vector<8x96xf32>, vector<96x64xf32>, vector<8x64xf32> -> vector<8x64xf32>
    %c0_55 = arith.constant 0 : index
    %c0_56 = arith.constant 0 : index
    %c0_57 = arith.constant 0 : index
    %133 = vector.load %arg10[%c0_55, %c0_56, %c0_57] : memref<2x1x64xf32, #tpu.memory_space<vmem>>, vector<1x1x64xf32>
    %134 = vector.shape_cast %133 : vector<1x1x64xf32> to vector<1x64xf32>
    %135 = vector.broadcast %134 : vector<1x64xf32> to vector<8x64xf32>
    %136 = arith.addf %132, %135 : vector<8x64xf32>
    %cst_58 = arith.constant 0.000000e+00 : f32
    %137 = vector.broadcast %cst_58 : f32 to vector<8x64xf32>
    %138 = arith.maximumf %136, %137 : vector<8x64xf32>
    %c1_i32_59 = arith.constant 1 : i32
    %139 = tpu.dynamic_rotate %138 by %c1_i32_59 dim 0 : vector<8x64xf32>, i32 -> vector<8x64xf32>
    %cst_60 = arith.constant 0.000000e+00 : f32
    %140 = vector.shape_cast %2 : vector<8x1xi1> to vector<8x1xi1>
    %141 = vector.broadcast %140 : vector<8x1xi1> to vector<8x64xi1>
    %142 = vector.broadcast %cst_60 : f32 to vector<8x64xf32>
    %143 = arith.select %141, %142, %139 : vector<8x64xi1>, vector<8x64xf32>
    %c7_i32_61 = arith.constant 7 : i32
    %144 = tpu.dynamic_rotate %138 by %c7_i32_61 dim 0 : vector<8x64xf32>, i32 -> vector<8x64xf32>
    %cst_62 = arith.constant 0.000000e+00 : f32
    %145 = vector.shape_cast %4 : vector<8x1xi1> to vector<8x1xi1>
    %146 = vector.broadcast %145 : vector<8x1xi1> to vector<8x64xi1>
    %147 = vector.broadcast %cst_62 : f32 to vector<8x64xf32>
    %148 = arith.select %146, %147, %144 : vector<8x64xi1>, vector<8x64xf32>
    %149 = tpu.concatenate %143, %138, %148 in 1 : vector<8x64xf32>, vector<8x64xf32>, vector<8x64xf32> -> vector<8x192xf32>
    %c0_63 = arith.constant 0 : index
    %c0_64 = arith.constant 0 : index
    %c0_65 = arith.constant 0 : index
    %150 = vector.load %arg11[%c0_63, %c0_64, %c0_65] : memref<2x192x32xf32, #tpu.memory_space<vmem>>, vector<1x192x32xf32>
    %151 = vector.shape_cast %150 : vector<1x192x32xf32> to vector<192x32xf32>
    %cst_66 = arith.constant dense<0.000000e+00> : vector<8x32xf32>
    %152 = tpu.matmul %149, %151, %cst_66 {dimension_numbers = #tpu.dot_dimension_numbers<[1], [0], [0], [1], [0, 0, 1, 1], [], []>} : vector<8x192xf32>, vector<192x32xf32>, vector<8x32xf32> -> vector<8x32xf32>
    %c0_67 = arith.constant 0 : index
    %c0_68 = arith.constant 0 : index
    %c0_69 = arith.constant 0 : index
    %153 = vector.load %arg12[%c0_67, %c0_68, %c0_69] : memref<2x1x32xf32, #tpu.memory_space<vmem>>, vector<1x1x32xf32>
    %154 = vector.shape_cast %153 : vector<1x1x32xf32> to vector<1x32xf32>
    %155 = vector.broadcast %154 : vector<1x32xf32> to vector<8x32xf32>
    %156 = arith.addf %152, %155 : vector<8x32xf32>
    %157 = arith.addf %156, %118 : vector<8x32xf32>
    %c0_70 = arith.constant 0 : index
    %c0_71 = arith.constant 0 : index
    %c0_72 = arith.constant 0 : index
    %158 = vector.load %arg13[%c0_70, %c0_71, %c0_72] : memref<2x1x32xf32, #tpu.memory_space<vmem>>, vector<1x1x32xf32>
    %159 = vector.shape_cast %158 : vector<1x1x32xf32> to vector<1x32xf32>
    %c0_73 = arith.constant 0 : index
    %c0_74 = arith.constant 0 : index
    %c0_75 = arith.constant 0 : index
    %160 = vector.load %arg14[%c0_73, %c0_74, %c0_75] : memref<2x1x32xf32, #tpu.memory_space<vmem>>, vector<1x1x32xf32>
    %161 = vector.shape_cast %160 : vector<1x1x32xf32> to vector<1x32xf32>
    %cst_76 = arith.constant dense<0.000000e+00> : vector<8xf32>
    %162 = vector.multi_reduction <add>, %157, %cst_76 [1] : vector<8x32xf32> to vector<8xf32>
    %163 = vector.shape_cast %162 : vector<8xf32> to vector<8x1xf32>
    %cst_77 = arith.constant 3.200000e+01 : f32
    %164 = vector.broadcast %cst_77 : f32 to vector<8x1xf32>
    %165 = arith.divf %163, %164 : vector<8x1xf32>
    %166 = vector.broadcast %165 : vector<8x1xf32> to vector<8x32xf32>
    %167 = arith.subf %157, %166 : vector<8x32xf32>
    %168 = arith.mulf %167, %167 : vector<8x32xf32>
    %cst_78 = arith.constant dense<0.000000e+00> : vector<8xf32>
    %169 = vector.multi_reduction <add>, %168, %cst_78 [1] : vector<8x32xf32> to vector<8xf32>
    %170 = vector.shape_cast %169 : vector<8xf32> to vector<8x1xf32>
    %cst_79 = arith.constant 3.200000e+01 : f32
    %171 = vector.broadcast %cst_79 : f32 to vector<8x1xf32>
    %172 = arith.divf %170, %171 : vector<8x1xf32>
    %173 = vector.broadcast %165 : vector<8x1xf32> to vector<8x32xf32>
    %174 = arith.subf %157, %173 : vector<8x32xf32>
    %cst_80 = arith.constant 9.99999974E-6 : f32
    %175 = vector.broadcast %cst_80 : f32 to vector<8x1xf32>
    %176 = arith.addf %172, %175 : vector<8x1xf32>
    %177 = math.rsqrt %176 : vector<8x1xf32>
    %178 = vector.broadcast %177 : vector<8x1xf32> to vector<8x32xf32>
    %179 = arith.mulf %174, %178 : vector<8x32xf32>
    %180 = vector.broadcast %159 : vector<1x32xf32> to vector<8x32xf32>
    %181 = arith.mulf %179, %180 : vector<8x32xf32>
    %182 = vector.broadcast %161 : vector<1x32xf32> to vector<8x32xf32>
    %183 = arith.addf %181, %182 : vector<8x32xf32>
    %c1 = arith.constant 1 : index
    %c0_81 = arith.constant 0 : index
    %c0_82 = arith.constant 0 : index
    %184 = vector.load %arg3[%c1, %c0_81, %c0_82] : memref<2x32x96xf32, #tpu.memory_space<vmem>>, vector<1x32x96xf32>
    %185 = vector.shape_cast %184 : vector<1x32x96xf32> to vector<32x96xf32>
    %cst_83 = arith.constant dense<0.000000e+00> : vector<8x96xf32>
    %186 = tpu.matmul %183, %185, %cst_83 {dimension_numbers = #tpu.dot_dimension_numbers<[1], [0], [0], [1], [0, 0, 1, 1], [], []>} : vector<8x32xf32>, vector<32x96xf32>, vector<8x96xf32> -> vector<8x96xf32>
    %c1_84 = arith.constant 1 : index
    %c0_85 = arith.constant 0 : index
    %c0_86 = arith.constant 0 : index
    %187 = vector.load %arg4[%c1_84, %c0_85, %c0_86] : memref<2x1x96xf32, #tpu.memory_space<vmem>>, vector<1x1x96xf32>
    %188 = vector.shape_cast %187 : vector<1x1x96xf32> to vector<1x96xf32>
    %189 = vector.broadcast %188 : vector<1x96xf32> to vector<8x96xf32>
    %190 = arith.addf %186, %189 : vector<8x96xf32>
    %191 = vector.extract_strided_slice %190 {offsets = [0, 0], sizes = [8, 8], strides = [1, 1]} : vector<8x96xf32> to vector<8x8xf32>
    %192 = vector.extract_strided_slice %190 {offsets = [0, 32], sizes = [8, 8], strides = [1, 1]} : vector<8x96xf32> to vector<8x8xf32>
    %193 = vector.extract_strided_slice %190 {offsets = [0, 64], sizes = [8, 8], strides = [1, 1]} : vector<8x96xf32> to vector<8x8xf32>
    "tpu.trace_start"() <{level = 10 : i32, message = "tc,sc->ts"}> : () -> ()
    %cst_87 = arith.constant dense<0.000000e+00> : vector<8x8xf32>
    %194 = tpu.matmul %191, %192, %cst_87 {dimension_numbers = #tpu.dot_dimension_numbers<[1], [1], [0], [0], [0, 0, 1, 0], [], []>} : vector<8x8xf32>, vector<8x8xf32>, vector<8x8xf32> -> vector<8x8xf32>
    "tpu.trace_stop"() : () -> ()
    %cst_88 = arith.constant 0.353553385 : f32
    %195 = vector.broadcast %cst_88 : f32 to vector<8x8xf32>
    %196 = arith.mulf %194, %195 : vector<8x8xf32>
    %cst_89 = arith.constant dense<0xFF800000> : vector<8xf32>
    %197 = vector.multi_reduction <maximumf>, %196, %cst_89 [1] : vector<8x8xf32> to vector<8xf32>
    %198 = vector.shape_cast %197 : vector<8xf32> to vector<8x1xf32>
    %199 = vector.broadcast %198 : vector<8x1xf32> to vector<8x8xf32>
    %200 = arith.subf %196, %199 : vector<8x8xf32>
    %201 = math.exp %200 : vector<8x8xf32>
    %cst_90 = arith.constant dense<0.000000e+00> : vector<8xf32>
    %202 = vector.multi_reduction <add>, %201, %cst_90 [1] : vector<8x8xf32> to vector<8xf32>
    %203 = vector.shape_cast %202 : vector<8xf32> to vector<8x1xf32>
    %204 = tpu.reciprocal %203 {approx = true} : vector<8x1xf32> -> vector<8x1xf32>
    %205 = vector.broadcast %204 : vector<8x1xf32> to vector<8x8xf32>
    %206 = arith.mulf %201, %205 : vector<8x8xf32>
    %cst_91 = arith.constant dense<0.000000e+00> : vector<8x8xf32>
    %207 = tpu.matmul %206, %193, %cst_91 {dimension_numbers = #tpu.dot_dimension_numbers<[1], [0], [0], [1], [0, 0, 1, 1], [], []>} : vector<8x8xf32>, vector<8x8xf32>, vector<8x8xf32> -> vector<8x8xf32>
    %208 = vector.extract_strided_slice %190 {offsets = [0, 8], sizes = [8, 8], strides = [1, 1]} : vector<8x96xf32> to vector<8x8xf32>
    %209 = vector.extract_strided_slice %190 {offsets = [0, 40], sizes = [8, 8], strides = [1, 1]} : vector<8x96xf32> to vector<8x8xf32>
    %210 = vector.extract_strided_slice %190 {offsets = [0, 72], sizes = [8, 8], strides = [1, 1]} : vector<8x96xf32> to vector<8x8xf32>
    "tpu.trace_start"() <{level = 10 : i32, message = "tc,sc->ts"}> : () -> ()
    %cst_92 = arith.constant dense<0.000000e+00> : vector<8x8xf32>
    %211 = tpu.matmul %208, %209, %cst_92 {dimension_numbers = #tpu.dot_dimension_numbers<[1], [1], [0], [0], [0, 0, 1, 0], [], []>} : vector<8x8xf32>, vector<8x8xf32>, vector<8x8xf32> -> vector<8x8xf32>
    "tpu.trace_stop"() : () -> ()
    %cst_93 = arith.constant 0.353553385 : f32
    %212 = vector.broadcast %cst_93 : f32 to vector<8x8xf32>
    %213 = arith.mulf %211, %212 : vector<8x8xf32>
    %cst_94 = arith.constant dense<0xFF800000> : vector<8xf32>
    %214 = vector.multi_reduction <maximumf>, %213, %cst_94 [1] : vector<8x8xf32> to vector<8xf32>
    %215 = vector.shape_cast %214 : vector<8xf32> to vector<8x1xf32>
    %216 = vector.broadcast %215 : vector<8x1xf32> to vector<8x8xf32>
    %217 = arith.subf %213, %216 : vector<8x8xf32>
    %218 = math.exp %217 : vector<8x8xf32>
    %cst_95 = arith.constant dense<0.000000e+00> : vector<8xf32>
    %219 = vector.multi_reduction <add>, %218, %cst_95 [1] : vector<8x8xf32> to vector<8xf32>
    %220 = vector.shape_cast %219 : vector<8xf32> to vector<8x1xf32>
    %221 = tpu.reciprocal %220 {approx = true} : vector<8x1xf32> -> vector<8x1xf32>
    %222 = vector.broadcast %221 : vector<8x1xf32> to vector<8x8xf32>
    %223 = arith.mulf %218, %222 : vector<8x8xf32>
    %cst_96 = arith.constant dense<0.000000e+00> : vector<8x8xf32>
    %224 = tpu.matmul %223, %210, %cst_96 {dimension_numbers = #tpu.dot_dimension_numbers<[1], [0], [0], [1], [0, 0, 1, 1], [], []>} : vector<8x8xf32>, vector<8x8xf32>, vector<8x8xf32> -> vector<8x8xf32>
    %225 = vector.extract_strided_slice %190 {offsets = [0, 16], sizes = [8, 8], strides = [1, 1]} : vector<8x96xf32> to vector<8x8xf32>
    %226 = vector.extract_strided_slice %190 {offsets = [0, 48], sizes = [8, 8], strides = [1, 1]} : vector<8x96xf32> to vector<8x8xf32>
    %227 = vector.extract_strided_slice %190 {offsets = [0, 80], sizes = [8, 8], strides = [1, 1]} : vector<8x96xf32> to vector<8x8xf32>
    "tpu.trace_start"() <{level = 10 : i32, message = "tc,sc->ts"}> : () -> ()
    %cst_97 = arith.constant dense<0.000000e+00> : vector<8x8xf32>
    %228 = tpu.matmul %225, %226, %cst_97 {dimension_numbers = #tpu.dot_dimension_numbers<[1], [1], [0], [0], [0, 0, 1, 0], [], []>} : vector<8x8xf32>, vector<8x8xf32>, vector<8x8xf32> -> vector<8x8xf32>
    "tpu.trace_stop"() : () -> ()
    %cst_98 = arith.constant 0.353553385 : f32
    %229 = vector.broadcast %cst_98 : f32 to vector<8x8xf32>
    %230 = arith.mulf %228, %229 : vector<8x8xf32>
    %cst_99 = arith.constant dense<0xFF800000> : vector<8xf32>
    %231 = vector.multi_reduction <maximumf>, %230, %cst_99 [1] : vector<8x8xf32> to vector<8xf32>
    %232 = vector.shape_cast %231 : vector<8xf32> to vector<8x1xf32>
    %233 = vector.broadcast %232 : vector<8x1xf32> to vector<8x8xf32>
    %234 = arith.subf %230, %233 : vector<8x8xf32>
    %235 = math.exp %234 : vector<8x8xf32>
    %cst_100 = arith.constant dense<0.000000e+00> : vector<8xf32>
    %236 = vector.multi_reduction <add>, %235, %cst_100 [1] : vector<8x8xf32> to vector<8xf32>
    %237 = vector.shape_cast %236 : vector<8xf32> to vector<8x1xf32>
    %238 = tpu.reciprocal %237 {approx = true} : vector<8x1xf32> -> vector<8x1xf32>
    %239 = vector.broadcast %238 : vector<8x1xf32> to vector<8x8xf32>
    %240 = arith.mulf %235, %239 : vector<8x8xf32>
    %cst_101 = arith.constant dense<0.000000e+00> : vector<8x8xf32>
    %241 = tpu.matmul %240, %227, %cst_101 {dimension_numbers = #tpu.dot_dimension_numbers<[1], [0], [0], [1], [0, 0, 1, 1], [], []>} : vector<8x8xf32>, vector<8x8xf32>, vector<8x8xf32> -> vector<8x8xf32>
    %242 = vector.extract_strided_slice %190 {offsets = [0, 24], sizes = [8, 8], strides = [1, 1]} : vector<8x96xf32> to vector<8x8xf32>
    %243 = vector.extract_strided_slice %190 {offsets = [0, 56], sizes = [8, 8], strides = [1, 1]} : vector<8x96xf32> to vector<8x8xf32>
    %244 = vector.extract_strided_slice %190 {offsets = [0, 88], sizes = [8, 8], strides = [1, 1]} : vector<8x96xf32> to vector<8x8xf32>
    "tpu.trace_start"() <{level = 10 : i32, message = "tc,sc->ts"}> : () -> ()
    %cst_102 = arith.constant dense<0.000000e+00> : vector<8x8xf32>
    %245 = tpu.matmul %242, %243, %cst_102 {dimension_numbers = #tpu.dot_dimension_numbers<[1], [1], [0], [0], [0, 0, 1, 0], [], []>} : vector<8x8xf32>, vector<8x8xf32>, vector<8x8xf32> -> vector<8x8xf32>
    "tpu.trace_stop"() : () -> ()
    %cst_103 = arith.constant 0.353553385 : f32
    %246 = vector.broadcast %cst_103 : f32 to vector<8x8xf32>
    %247 = arith.mulf %245, %246 : vector<8x8xf32>
    %cst_104 = arith.constant dense<0xFF800000> : vector<8xf32>
    %248 = vector.multi_reduction <maximumf>, %247, %cst_104 [1] : vector<8x8xf32> to vector<8xf32>
    %249 = vector.shape_cast %248 : vector<8xf32> to vector<8x1xf32>
    %250 = vector.broadcast %249 : vector<8x1xf32> to vector<8x8xf32>
    %251 = arith.subf %247, %250 : vector<8x8xf32>
    %252 = math.exp %251 : vector<8x8xf32>
    %cst_105 = arith.constant dense<0.000000e+00> : vector<8xf32>
    %253 = vector.multi_reduction <add>, %252, %cst_105 [1] : vector<8x8xf32> to vector<8xf32>
    %254 = vector.shape_cast %253 : vector<8xf32> to vector<8x1xf32>
    %255 = tpu.reciprocal %254 {approx = true} : vector<8x1xf32> -> vector<8x1xf32>
    %256 = vector.broadcast %255 : vector<8x1xf32> to vector<8x8xf32>
    %257 = arith.mulf %252, %256 : vector<8x8xf32>
    %cst_106 = arith.constant dense<0.000000e+00> : vector<8x8xf32>
    %258 = tpu.matmul %257, %244, %cst_106 {dimension_numbers = #tpu.dot_dimension_numbers<[1], [0], [0], [1], [0, 0, 1, 1], [], []>} : vector<8x8xf32>, vector<8x8xf32>, vector<8x8xf32> -> vector<8x8xf32>
    %259 = tpu.concatenate %207, %224, %241, %258 in 1 : vector<8x8xf32>, vector<8x8xf32>, vector<8x8xf32>, vector<8x8xf32> -> vector<8x32xf32>
    %c1_107 = arith.constant 1 : index
    %c0_108 = arith.constant 0 : index
    %c0_109 = arith.constant 0 : index
    %260 = vector.load %arg5[%c1_107, %c0_108, %c0_109] : memref<2x32x32xf32, #tpu.memory_space<vmem>>, vector<1x32x32xf32>
    %261 = vector.shape_cast %260 : vector<1x32x32xf32> to vector<32x32xf32>
    %cst_110 = arith.constant dense<0.000000e+00> : vector<8x32xf32>
    %262 = tpu.matmul %259, %261, %cst_110 {dimension_numbers = #tpu.dot_dimension_numbers<[1], [0], [0], [1], [0, 0, 1, 1], [], []>} : vector<8x32xf32>, vector<32x32xf32>, vector<8x32xf32> -> vector<8x32xf32>
    %c1_111 = arith.constant 1 : index
    %c0_112 = arith.constant 0 : index
    %c0_113 = arith.constant 0 : index
    %263 = vector.load %arg6[%c1_111, %c0_112, %c0_113] : memref<2x1x32xf32, #tpu.memory_space<vmem>>, vector<1x1x32xf32>
    %264 = vector.shape_cast %263 : vector<1x1x32xf32> to vector<1x32xf32>
    %265 = vector.broadcast %264 : vector<1x32xf32> to vector<8x32xf32>
    %266 = arith.addf %262, %265 : vector<8x32xf32>
    %267 = arith.addf %266, %183 : vector<8x32xf32>
    %c1_114 = arith.constant 1 : index
    %c0_115 = arith.constant 0 : index
    %c0_116 = arith.constant 0 : index
    %268 = vector.load %arg7[%c1_114, %c0_115, %c0_116] : memref<2x1x32xf32, #tpu.memory_space<vmem>>, vector<1x1x32xf32>
    %269 = vector.shape_cast %268 : vector<1x1x32xf32> to vector<1x32xf32>
    %c1_117 = arith.constant 1 : index
    %c0_118 = arith.constant 0 : index
    %c0_119 = arith.constant 0 : index
    %270 = vector.load %arg8[%c1_117, %c0_118, %c0_119] : memref<2x1x32xf32, #tpu.memory_space<vmem>>, vector<1x1x32xf32>
    %271 = vector.shape_cast %270 : vector<1x1x32xf32> to vector<1x32xf32>
    %cst_120 = arith.constant dense<0.000000e+00> : vector<8xf32>
    %272 = vector.multi_reduction <add>, %267, %cst_120 [1] : vector<8x32xf32> to vector<8xf32>
    %273 = vector.shape_cast %272 : vector<8xf32> to vector<8x1xf32>
    %cst_121 = arith.constant 3.200000e+01 : f32
    %274 = vector.broadcast %cst_121 : f32 to vector<8x1xf32>
    %275 = arith.divf %273, %274 : vector<8x1xf32>
    %276 = vector.broadcast %275 : vector<8x1xf32> to vector<8x32xf32>
    %277 = arith.subf %267, %276 : vector<8x32xf32>
    %278 = arith.mulf %277, %277 : vector<8x32xf32>
    %cst_122 = arith.constant dense<0.000000e+00> : vector<8xf32>
    %279 = vector.multi_reduction <add>, %278, %cst_122 [1] : vector<8x32xf32> to vector<8xf32>
    %280 = vector.shape_cast %279 : vector<8xf32> to vector<8x1xf32>
    %cst_123 = arith.constant 3.200000e+01 : f32
    %281 = vector.broadcast %cst_123 : f32 to vector<8x1xf32>
    %282 = arith.divf %280, %281 : vector<8x1xf32>
    %283 = vector.broadcast %275 : vector<8x1xf32> to vector<8x32xf32>
    %284 = arith.subf %267, %283 : vector<8x32xf32>
    %cst_124 = arith.constant 9.99999974E-6 : f32
    %285 = vector.broadcast %cst_124 : f32 to vector<8x1xf32>
    %286 = arith.addf %282, %285 : vector<8x1xf32>
    %287 = math.rsqrt %286 : vector<8x1xf32>
    %288 = vector.broadcast %287 : vector<8x1xf32> to vector<8x32xf32>
    %289 = arith.mulf %284, %288 : vector<8x32xf32>
    %290 = vector.broadcast %269 : vector<1x32xf32> to vector<8x32xf32>
    %291 = arith.mulf %289, %290 : vector<8x32xf32>
    %292 = vector.broadcast %271 : vector<1x32xf32> to vector<8x32xf32>
    %293 = arith.addf %291, %292 : vector<8x32xf32>
    %c1_i32_125 = arith.constant 1 : i32
    %294 = tpu.dynamic_rotate %293 by %c1_i32_125 dim 0 : vector<8x32xf32>, i32 -> vector<8x32xf32>
    %cst_126 = arith.constant 0.000000e+00 : f32
    %295 = vector.shape_cast %2 : vector<8x1xi1> to vector<8x1xi1>
    %296 = vector.broadcast %295 : vector<8x1xi1> to vector<8x32xi1>
    %297 = vector.broadcast %cst_126 : f32 to vector<8x32xf32>
    %298 = arith.select %296, %297, %294 : vector<8x32xi1>, vector<8x32xf32>
    %c7_i32_127 = arith.constant 7 : i32
    %299 = tpu.dynamic_rotate %293 by %c7_i32_127 dim 0 : vector<8x32xf32>, i32 -> vector<8x32xf32>
    %cst_128 = arith.constant 0.000000e+00 : f32
    %300 = vector.shape_cast %4 : vector<8x1xi1> to vector<8x1xi1>
    %301 = vector.broadcast %300 : vector<8x1xi1> to vector<8x32xi1>
    %302 = vector.broadcast %cst_128 : f32 to vector<8x32xf32>
    %303 = arith.select %301, %302, %299 : vector<8x32xi1>, vector<8x32xf32>
    %304 = tpu.concatenate %298, %293, %303 in 1 : vector<8x32xf32>, vector<8x32xf32>, vector<8x32xf32> -> vector<8x96xf32>
    %c1_129 = arith.constant 1 : index
    %c0_130 = arith.constant 0 : index
    %c0_131 = arith.constant 0 : index
    %305 = vector.load %arg9[%c1_129, %c0_130, %c0_131] : memref<2x96x64xf32, #tpu.memory_space<vmem>>, vector<1x96x64xf32>
    %306 = vector.shape_cast %305 : vector<1x96x64xf32> to vector<96x64xf32>
    %cst_132 = arith.constant dense<0.000000e+00> : vector<8x64xf32>
    %307 = tpu.matmul %304, %306, %cst_132 {dimension_numbers = #tpu.dot_dimension_numbers<[1], [0], [0], [1], [0, 0, 1, 1], [], []>} : vector<8x96xf32>, vector<96x64xf32>, vector<8x64xf32> -> vector<8x64xf32>
    %c1_133 = arith.constant 1 : index
    %c0_134 = arith.constant 0 : index
    %c0_135 = arith.constant 0 : index
    %308 = vector.load %arg10[%c1_133, %c0_134, %c0_135] : memref<2x1x64xf32, #tpu.memory_space<vmem>>, vector<1x1x64xf32>
    %309 = vector.shape_cast %308 : vector<1x1x64xf32> to vector<1x64xf32>
    %310 = vector.broadcast %309 : vector<1x64xf32> to vector<8x64xf32>
    %311 = arith.addf %307, %310 : vector<8x64xf32>
    %cst_136 = arith.constant 0.000000e+00 : f32
    %312 = vector.broadcast %cst_136 : f32 to vector<8x64xf32>
    %313 = arith.maximumf %311, %312 : vector<8x64xf32>
    %c1_i32_137 = arith.constant 1 : i32
    %314 = tpu.dynamic_rotate %313 by %c1_i32_137 dim 0 : vector<8x64xf32>, i32 -> vector<8x64xf32>
    %cst_138 = arith.constant 0.000000e+00 : f32
    %315 = vector.shape_cast %2 : vector<8x1xi1> to vector<8x1xi1>
    %316 = vector.broadcast %315 : vector<8x1xi1> to vector<8x64xi1>
    %317 = vector.broadcast %cst_138 : f32 to vector<8x64xf32>
    %318 = arith.select %316, %317, %314 : vector<8x64xi1>, vector<8x64xf32>
    %c7_i32_139 = arith.constant 7 : i32
    %319 = tpu.dynamic_rotate %313 by %c7_i32_139 dim 0 : vector<8x64xf32>, i32 -> vector<8x64xf32>
    %cst_140 = arith.constant 0.000000e+00 : f32
    %320 = vector.shape_cast %4 : vector<8x1xi1> to vector<8x1xi1>
    %321 = vector.broadcast %320 : vector<8x1xi1> to vector<8x64xi1>
    %322 = vector.broadcast %cst_140 : f32 to vector<8x64xf32>
    %323 = arith.select %321, %322, %319 : vector<8x64xi1>, vector<8x64xf32>
    %324 = tpu.concatenate %318, %313, %323 in 1 : vector<8x64xf32>, vector<8x64xf32>, vector<8x64xf32> -> vector<8x192xf32>
    %c1_141 = arith.constant 1 : index
    %c0_142 = arith.constant 0 : index
    %c0_143 = arith.constant 0 : index
    %325 = vector.load %arg11[%c1_141, %c0_142, %c0_143] : memref<2x192x32xf32, #tpu.memory_space<vmem>>, vector<1x192x32xf32>
    %326 = vector.shape_cast %325 : vector<1x192x32xf32> to vector<192x32xf32>
    %cst_144 = arith.constant dense<0.000000e+00> : vector<8x32xf32>
    %327 = tpu.matmul %324, %326, %cst_144 {dimension_numbers = #tpu.dot_dimension_numbers<[1], [0], [0], [1], [0, 0, 1, 1], [], []>} : vector<8x192xf32>, vector<192x32xf32>, vector<8x32xf32> -> vector<8x32xf32>
    %c1_145 = arith.constant 1 : index
    %c0_146 = arith.constant 0 : index
    %c0_147 = arith.constant 0 : index
    %328 = vector.load %arg12[%c1_145, %c0_146, %c0_147] : memref<2x1x32xf32, #tpu.memory_space<vmem>>, vector<1x1x32xf32>
    %329 = vector.shape_cast %328 : vector<1x1x32xf32> to vector<1x32xf32>
    %330 = vector.broadcast %329 : vector<1x32xf32> to vector<8x32xf32>
    %331 = arith.addf %327, %330 : vector<8x32xf32>
    %332 = arith.addf %331, %293 : vector<8x32xf32>
    %c1_148 = arith.constant 1 : index
    %c0_149 = arith.constant 0 : index
    %c0_150 = arith.constant 0 : index
    %333 = vector.load %arg13[%c1_148, %c0_149, %c0_150] : memref<2x1x32xf32, #tpu.memory_space<vmem>>, vector<1x1x32xf32>
    %334 = vector.shape_cast %333 : vector<1x1x32xf32> to vector<1x32xf32>
    %c1_151 = arith.constant 1 : index
    %c0_152 = arith.constant 0 : index
    %c0_153 = arith.constant 0 : index
    %335 = vector.load %arg14[%c1_151, %c0_152, %c0_153] : memref<2x1x32xf32, #tpu.memory_space<vmem>>, vector<1x1x32xf32>
    %336 = vector.shape_cast %335 : vector<1x1x32xf32> to vector<1x32xf32>
    %cst_154 = arith.constant dense<0.000000e+00> : vector<8xf32>
    %337 = vector.multi_reduction <add>, %332, %cst_154 [1] : vector<8x32xf32> to vector<8xf32>
    %338 = vector.shape_cast %337 : vector<8xf32> to vector<8x1xf32>
    %cst_155 = arith.constant 3.200000e+01 : f32
    %339 = vector.broadcast %cst_155 : f32 to vector<8x1xf32>
    %340 = arith.divf %338, %339 : vector<8x1xf32>
    %341 = vector.broadcast %340 : vector<8x1xf32> to vector<8x32xf32>
    %342 = arith.subf %332, %341 : vector<8x32xf32>
    %343 = arith.mulf %342, %342 : vector<8x32xf32>
    %cst_156 = arith.constant dense<0.000000e+00> : vector<8xf32>
    %344 = vector.multi_reduction <add>, %343, %cst_156 [1] : vector<8x32xf32> to vector<8xf32>
    %345 = vector.shape_cast %344 : vector<8xf32> to vector<8x1xf32>
    %cst_157 = arith.constant 3.200000e+01 : f32
    %346 = vector.broadcast %cst_157 : f32 to vector<8x1xf32>
    %347 = arith.divf %345, %346 : vector<8x1xf32>
    %348 = vector.broadcast %340 : vector<8x1xf32> to vector<8x32xf32>
    %349 = arith.subf %332, %348 : vector<8x32xf32>
    %cst_158 = arith.constant 9.99999974E-6 : f32
    %350 = vector.broadcast %cst_158 : f32 to vector<8x1xf32>
    %351 = arith.addf %347, %350 : vector<8x1xf32>
    %352 = math.rsqrt %351 : vector<8x1xf32>
    %353 = vector.broadcast %352 : vector<8x1xf32> to vector<8x32xf32>
    %354 = arith.mulf %349, %353 : vector<8x32xf32>
    %355 = vector.broadcast %334 : vector<1x32xf32> to vector<8x32xf32>
    %356 = arith.mulf %354, %355 : vector<8x32xf32>
    %357 = vector.broadcast %336 : vector<1x32xf32> to vector<8x32xf32>
    %358 = arith.addf %356, %357 : vector<8x32xf32>
    %c0_159 = arith.constant 0 : index
    %c0_160 = arith.constant 0 : index
    %c0_161 = arith.constant 0 : index
    %359 = vector.load %arg15[%c0_159, %c0_160, %c0_161] : memref<1x8x32xf32, #tpu.memory_space<vmem>>, vector<1x8x32xf32>
    %360 = vector.shape_cast %359 : vector<1x8x32xf32> to vector<8x32xf32>
    %361 = vector.shape_cast %358 : vector<8x32xf32> to vector<1x8x32xf32>
    tpu.vector_store %arg15[%c0_159, %c0_160, %c0_161], %361 {strides = array<i32>} : memref<1x8x32xf32, #tpu.memory_space<vmem>>, vector<1x8x32xf32>,
    return
  }
  func.func @transform_0(%arg0: i32) -> (i32, i32, i32) {
    %c0_i32 = arith.constant 0 : i32
    %c0_i32_0 = arith.constant 0 : i32
    %c0_i32_1 = arith.constant 0 : i32
    return %arg0, %c0_i32, %c0_i32_0 : i32, i32, i32
  }
  func.func @transform_1(%arg0: i32) -> (i32, i32) {
    %c0_i32 = arith.constant 0 : i32
    %c0_i32_0 = arith.constant 0 : i32
    %c0_i32_1 = arith.constant 0 : i32
    return %c0_i32, %c0_i32_0 : i32, i32
  }
  func.func @transform_2(%arg0: i32) -> (i32, i32, i32) {
    %c0_i32 = arith.constant 0 : i32
    %c0_i32_0 = arith.constant 0 : i32
    %c0_i32_1 = arith.constant 0 : i32
    %c0_i32_2 = arith.constant 0 : i32
    return %c0_i32, %c0_i32_0, %c0_i32_1 : i32, i32, i32
  }
  func.func @transform_3(%arg0: i32) -> (i32, i32, i32) {
    %c0_i32 = arith.constant 0 : i32
    %c0_i32_0 = arith.constant 0 : i32
    %c0_i32_1 = arith.constant 0 : i32
    %c0_i32_2 = arith.constant 0 : i32
    return %c0_i32, %c0_i32_0, %c0_i32_1 : i32, i32, i32
  }
  func.func @transform_4(%arg0: i32) -> (i32, i32, i32) {
    %c0_i32 = arith.constant 0 : i32
    %c0_i32_0 = arith.constant 0 : i32
    %c0_i32_1 = arith.constant 0 : i32
    %c0_i32_2 = arith.constant 0 : i32
    return %c0_i32, %c0_i32_0, %c0_i32_1 : i32, i32, i32
  }
  func.func @transform_5(%arg0: i32) -> (i32, i32, i32) {
    %c0_i32 = arith.constant 0 : i32
    %c0_i32_0 = arith.constant 0 : i32
    %c0_i32_1 = arith.constant 0 : i32
    %c0_i32_2 = arith.constant 0 : i32
    return %c0_i32, %c0_i32_0, %c0_i32_1 : i32, i32, i32
  }
  func.func @transform_6(%arg0: i32) -> (i32, i32, i32) {
    %c0_i32 = arith.constant 0 : i32
    %c0_i32_0 = arith.constant 0 : i32
    %c0_i32_1 = arith.constant 0 : i32
    %c0_i32_2 = arith.constant 0 : i32
    return %c0_i32, %c0_i32_0, %c0_i32_1 : i32, i32, i32
  }
  func.func @transform_7(%arg0: i32) -> (i32, i32, i32) {
    %c0_i32 = arith.constant 0 : i32
    %c0_i32_0 = arith.constant 0 : i32
    %c0_i32_1 = arith.constant 0 : i32
    %c0_i32_2 = arith.constant 0 : i32
    return %c0_i32, %c0_i32_0, %c0_i32_1 : i32, i32, i32
  }
  func.func @transform_8(%arg0: i32) -> (i32, i32, i32) {
    %c0_i32 = arith.constant 0 : i32
    %c0_i32_0 = arith.constant 0 : i32
    %c0_i32_1 = arith.constant 0 : i32
    %c0_i32_2 = arith.constant 0 : i32
    return %c0_i32, %c0_i32_0, %c0_i32_1 : i32, i32, i32
  }
  func.func @transform_9(%arg0: i32) -> (i32, i32, i32) {
    %c0_i32 = arith.constant 0 : i32
    %c0_i32_0 = arith.constant 0 : i32
    %c0_i32_1 = arith.constant 0 : i32
    %c0_i32_2 = arith.constant 0 : i32
    return %c0_i32, %c0_i32_0, %c0_i32_1 : i32, i32, i32
  }
  func.func @transform_10(%arg0: i32) -> (i32, i32, i32) {
    %c0_i32 = arith.constant 0 : i32
    %c0_i32_0 = arith.constant 0 : i32
    %c0_i32_1 = arith.constant 0 : i32
    %c0_i32_2 = arith.constant 0 : i32
    return %c0_i32, %c0_i32_0, %c0_i32_1 : i32, i32, i32
  }
  func.func @transform_11(%arg0: i32) -> (i32, i32, i32) {
    %c0_i32 = arith.constant 0 : i32
    %c0_i32_0 = arith.constant 0 : i32
    %c0_i32_1 = arith.constant 0 : i32
    %c0_i32_2 = arith.constant 0 : i32
    return %c0_i32, %c0_i32_0, %c0_i32_1 : i32, i32, i32
  }
  func.func @transform_12(%arg0: i32) -> (i32, i32, i32) {
    %c0_i32 = arith.constant 0 : i32
    %c0_i32_0 = arith.constant 0 : i32
    %c0_i32_1 = arith.constant 0 : i32
    %c0_i32_2 = arith.constant 0 : i32
    return %c0_i32, %c0_i32_0, %c0_i32_1 : i32, i32, i32
  }
  func.func @transform_13(%arg0: i32) -> (i32, i32, i32) {
    %c0_i32 = arith.constant 0 : i32
    %c0_i32_0 = arith.constant 0 : i32
    %c0_i32_1 = arith.constant 0 : i32
    %c0_i32_2 = arith.constant 0 : i32
    return %c0_i32, %c0_i32_0, %c0_i32_1 : i32, i32, i32
  }
  func.func @transform_14(%arg0: i32) -> (i32, i32, i32) {
    %c0_i32 = arith.constant 0 : i32
    %c0_i32_0 = arith.constant 0 : i32
    %c0_i32_1 = arith.constant 0 : i32
    return %arg0, %c0_i32, %c0_i32_0 : i32, i32, i32
  }
}

</mosaic_0001>

<llo_original>
// kernel: decoder_forward.1
$region0: #{decoder_forward.1}
  #allocation0 [shape = 'u32[]', space=smem, size = 0x4, offset = 0x4, fixed_abs, tag = 'smem constant byte address 0x4 - core index']
  #allocation1 [shape = 'u32[72,128]{1,0:T(1,128)}', space=vmem, size = 0x9000, scoped, tag = 'internal scratch']
  %s0 = inlined_call_operand.vmem [shape: f32[2,8,32], index: 0, kind: input, shape index: {}]
  %s1 = inlined_call_operand.vmem [shape: f32[8,32], index: 1, kind: input, shape index: {}]
  %s2 = inlined_call_operand.vmem [shape: f32[2,32,96], index: 2, kind: input, shape index: {}]
  %s3 = inlined_call_operand.vmem [shape: f32[2,1,96], index: 3, kind: input, shape index: {}]
  %s4 = inlined_call_operand.vmem [shape: f32[2,32,32], index: 4, kind: input, shape index: {}]
  %s5 = inlined_call_operand.vmem [shape: f32[2,1,32], index: 5, kind: input, shape index: {}]
  %s6 = inlined_call_operand.vmem [shape: f32[2,1,32], index: 6, kind: input, shape index: {}]
  %s7 = inlined_call_operand.vmem [shape: f32[2,1,32], index: 7, kind: input, shape index: {}]
  %s8 = inlined_call_operand.vmem [shape: f32[2,96,64], index: 8, kind: input, shape index: {}]
  %s9 = inlined_call_operand.vmem [shape: f32[2,1,64], index: 9, kind: input, shape index: {}]
  %s10 = inlined_call_operand.vmem [shape: f32[2,192,32], index: 10, kind: input, shape index: {}]
  %s11 = inlined_call_operand.vmem [shape: f32[2,1,32], index: 11, kind: input, shape index: {}]
  %s12 = inlined_call_operand.vmem [shape: f32[2,1,32], index: 12, kind: input, shape index: {}]
  %s13 = inlined_call_operand.vmem [shape: f32[2,1,32], index: 13, kind: input, shape index: {}]
  %s14 = inlined_call_operand.hbm [shape: f32[2,8,32], index: 14, kind: output, shape index: {}]
  %s15 = sld [smem:[#allocation0]]
  $region89: #{decoder_forward.1} parent=0
    _
  %s17 = ssub.s32 1, %s15
  %s18 = scalar_select 0, %s17, %s15
  $region1: #{decoder_forward.1} parent=0
    #allocation2 [shape = 'u8[8192]{0}', space=vmem, size = 0x2000, scoped, tag = 'output window, operand 0']
    #allocation3 [shape = 's32[2]{0}', space=sflag, size = 0x8, scoped, tag = 'scoped memory for decoder_forward.1']
    %19 = vsyncpa [#allocation3], 0
    %s20 = scalar_lea.sflag [#allocation3], 1
    %21 = vsyncpa %s20, 0
    loop: start=0, step=1, limit=4
    $region2: #{decoder_forward.1} parent=1 // loop_pre_header
      _
    $region3: #{decoder_forward.1} parent=1 // loop_header
      %s23 = sphi 0, %s27
      %p24 = scmp.ge.s32.totalorder %s23, 4
      %s33 = sphi 0, %s35
      %s36 = sphi 0, %s33
      %s37 = sphi 0, %s36
      %s53 = sphi 0, %s37
      %s57 = sphi 0, %s57
      %s59 = sphi 0, %s57
      %s60 = sphi 0, %s59
      %s74 = sphi 0, %s60
      %s78 = sphi 0, %s78
      %s80 = sphi 0, %s78
      %s81 = sphi 0, %s80
      %s95 = sphi 0, %s81
      %s99 = sphi 0, %s99
      %s101 = sphi 0, %s99
      %s102 = sphi 0, %s101
      %s116 = sphi 0, %s102
      %s120 = sphi 0, %s120
      %s122 = sphi 0, %s120
      %s123 = sphi 0, %s122
      %s137 = sphi 0, %s123
      %s141 = sphi 0, %s141
      %s143 = sphi 0, %s141
      %s144 = sphi 0, %s143
      %s158 = sphi 0, %s144
      %s162 = sphi 0, %s162
      %s164 = sphi 0, %s162
      %s165 = sphi 0, %s164
      %s179 = sphi 0, %s165
      %s183 = sphi 0, %s183
      %s185 = sphi 0, %s183
      %s186 = sphi 0, %s185
      %s200 = sphi 0, %s186
      %s204 = sphi 0, %s204
      %s206 = sphi 0, %s204
      %s207 = sphi 0, %s206
      %s221 = sphi 0, %s207
      %s225 = sphi 0, %s225
      %s227 = sphi 0, %s225
      %s228 = sphi 0, %s227
      %s242 = sphi 0, %s228
      %s246 = sphi 0, %s246
      %s248 = sphi 0, %s246
      %s249 = sphi 0, %s248
      %s263 = sphi 0, %s249
      %s267 = sphi 0, %s267
      %s269 = sphi 0, %s267
      %s270 = sphi 0, %s269
      %s284 = sphi 0, %s270
      %s288 = sphi 0, %s288
      %s290 = sphi 0, %s288
      %s291 = sphi 0, %s290
      %s305 = sphi 0, %s291
      %s309 = sphi 0, %s309
      %s311 = sphi 0, %s309
      %s312 = sphi 0, %s311
      %s326 = sphi 0, %s312
      %s332 = sphi 0, %s334
      %s335 = sphi 0, %s332
      %s336 = sphi 0, %s335
      %s352 = sphi 0, %s336
    $region4: #{decoder_forward.1} parent=1 // loop_header_branch
      %26 = sbr.rel (%p24) target = $region8
    $region5: #{decoder_forward.1} parent=1 // loop_body
      %s28 = ssub.s32 %s23, 1
      %s29 = ssub.s32 %s23, 2
      %s30 = sadd.s32 %s23, 1
      %s31 = ssub.s32 %s23, %s30
      %p32 = scmp.eq.s32.totalorder %s31, 0
      %s34 = sadd.s32 %s33, 1
      %s35 = scalar_select %p32, %s33, %s34
      %p38 = pneg %p32
      %p39 = scmp.eq.s32.totalorder %s23, 1
      %p40 = por %p38, %p39
      %p41 = scmp.ne.s32.totalorder %s33, %s36
      %p42 = scmp.eq.s32.totalorder %s23, 0
      %p43 = por %p41, %p42
      %p44 = scmp.ne.s32.totalorder %s33, %s36
      %p45 = scmp.eq.s32.totalorder %s28, 1
      %p46 = por %p44, %p45
      %p47 = scmp.ne.s32.totalorder %s36, %s37
      %p48 = scmp.eq.s32.totalorder %s28, 0
      %p49 = por %p47, %p48
      %p50 = scmp.ne.s32.totalorder %s36, %s37
      %p51 = scmp.eq.s32.totalorder %s29, 1
      %p52 = por %p50, %p51
      %p54 = scmp.ne.s32.totalorder %s37, %s53
      %p55 = scmp.eq.s32.totalorder %s29, 0
      %p56 = por %p54, %p55
      %s58 = sadd.s32 %s57, 1
      %p61 = scmp.eq.s32.totalorder %s23, 1
      %p62 = scmp.ne.s32.totalorder %s57, %s59
      %p63 = scmp.eq.s32.totalorder %s23, 0
      %p64 = por %p62, %p63
      %p65 = scmp.ne.s32.totalorder %s57, %s59
      %p66 = scmp.eq.s32.totalorder %s28, 1
      %p67 = por %p65, %p66
      %p68 = scmp.ne.s32.totalorder %s59, %s60
      %p69 = scmp.eq.s32.totalorder %s28, 0
      %p70 = por %p68, %p69
      %p71 = scmp.ne.s32.totalorder %s59, %s60
      %p72 = scmp.eq.s32.totalorder %s29, 1
      %p73 = por %p71, %p72
      %p75 = scmp.ne.s32.totalorder %s60, %s74
      %p76 = scmp.eq.s32.totalorder %s29, 0
      %p77 = por %p75, %p76
      %s79 = sadd.s32 %s78, 1
      %p82 = scmp.eq.s32.totalorder %s23, 1
      %p83 = scmp.ne.s32.totalorder %s78, %s80
      %p84 = scmp.eq.s32.totalorder %s23, 0
      %p85 = por %p83, %p84
      %p86 = scmp.ne.s32.totalorder %s78, %s80
      %p87 = scmp.eq.s32.totalorder %s28, 1
      %p88 = por %p86, %p87
      %p89 = scmp.ne.s32.totalorder %s80, %s81
      %p90 = scmp.eq.s32.totalorder %s28, 0
      %p91 = por %p89, %p90
      %p92 = scmp.ne.s32.totalorder %s80, %s81
      %p93 = scmp.eq.s32.totalorder %s29, 1
      %p94 = por %p92, %p93
      %p96 = scmp.ne.s32.totalorder %s81, %s95
      %p97 = scmp.eq.s32.totalorder %s29, 0
      %p98 = por %p96, %p97
      %s100 = sadd.s32 %s99, 1
      %p103 = scmp.eq.s32.totalorder %s23, 1
      %p104 = scmp.ne.s32.totalorder %s99, %s101
      %p105 = scmp.eq.s32.totalorder %s23, 0
      %p106 = por %p104, %p105
      %p107 = scmp.ne.s32.totalorder %s99, %s101
      %p108 = scmp.eq.s32.totalorder %s28, 1
      %p109 = por %p107, %p108
      %p110 = scmp.ne.s32.totalorder %s101, %s102
      %p111 = scmp.eq.s32.totalorder %s28, 0
      %p112 = por %p110, %p111
      %p113 = scmp.ne.s32.totalorder %s101, %s102
      %p114 = scmp.eq.s32.totalorder %s29, 1
      %p115 = por %p113, %p114
      %p117 = scmp.ne.s32.totalorder %s102, %s116
      %p118 = scmp.eq.s32.totalorder %s29, 0
      %p119 = por %p117, %p118
      %s121 = sadd.s32 %s120, 1
      %p124 = scmp.eq.s32.totalorder %s23, 1
      %p125 = scmp.ne.s32.totalorder %s120, %s122
      %p126 = scmp.eq.s32.totalorder %s23, 0
      %p127 = por %p125, %p126
      %p128 = scmp.ne.s32.totalorder %s120, %s122
      %p129 = scmp.eq.s32.totalorder %s28, 1
      %p130 = por %p128, %p129
      %p131 = scmp.ne.s32.totalorder %s122, %s123
      %p132 = scmp.eq.s32.totalorder %s28, 0
      %p133 = por %p131, %p132
      %p134 = scmp.ne.s32.totalorder %s122, %s123
      %p135 = scmp.eq.s32.totalorder %s29, 1
      %p136 = por %p134, %p135
      %p138 = scmp.ne.s32.totalorder %s123, %s137
      %p139 = scmp.eq.s32.totalorder %s29, 0
      %p140 = por %p138, %p139
      %s142 = sadd.s32 %s141, 1
      %p145 = scmp.eq.s32.totalorder %s23, 1
      %p146 = scmp.ne.s32.totalorder %s141, %s143
      %p147 = scmp.eq.s32.totalorder %s23, 0
      %p148 = por %p146, %p147
      %p149 = scmp.ne.s32.totalorder %s141, %s143
      %p150 = scmp.eq.s32.totalorder %s28, 1
      %p151 = por %p149, %p150
      %p152 = scmp.ne.s32.totalorder %s143, %s144
      %p153 = scmp.eq.s32.totalorder %s28, 0
      %p154 = por %p152, %p153
      %p155 = scmp.ne.s32.totalorder %s143, %s144
      %p156 = scmp.eq.s32.totalorder %s29, 1
      %p157 = por %p155, %p156
      %p159 = scmp.ne.s32.totalorder %s144, %s158
      %p160 = scmp.eq.s32.totalorder %s29, 0
      %p161 = por %p159, %p160
      %s163 = sadd.s32 %s162, 1
      %p166 = scmp.eq.s32.totalorder %s23, 1
      %p167 = scmp.ne.s32.totalorder %s162, %s164
      %p168 = scmp.eq.s32.totalorder %s23, 0
      %p169 = por %p167, %p168
      %p170 = scmp.ne.s32.totalorder %s162, %s164
      %p171 = scmp.eq.s32.totalorder %s28, 1
      %p172 = por %p170, %p171
      %p173 = scmp.ne.s32.totalorder %s164, %s165
      %p174 = scmp.eq.s32.totalorder %s28, 0
      %p175 = por %p173, %p174
      %p176 = scmp.ne.s32.totalorder %s164, %s165
      %p177 = scmp.eq.s32.totalorder %s29, 1
      %p178 = por %p176, %p177
      %p180 = scmp.ne.s32.totalorder %s165, %s179
      %p181 = scmp.eq.s32.totalorder %s29, 0
      %p182 = por %p180, %p181
      %s184 = sadd.s32 %s183, 1
      %p187 = scmp.eq.s32.totalorder %s23, 1
      %p188 = scmp.ne.s32.totalorder %s183, %s185
      %p189 = scmp.eq.s32.totalorder %s23, 0
      %p190 = por %p188, %p189
      %p191 = scmp.ne.s32.totalorder %s183, %s185
      %p192 = scmp.eq.s32.totalorder %s28, 1
      %p193 = por %p191, %p192
      %p194 = scmp.ne.s32.totalorder %s185, %s186
      %p195 = scmp.eq.s32.totalorder %s28, 0
      %p196 = por %p194, %p195
      %p197 = scmp.ne.s32.totalorder %s185, %s186
      %p198 = scmp.eq.s32.totalorder %s29, 1
      %p199 = por %p197, %p198
      %p201 = scmp.ne.s32.totalorder %s186, %s200
      %p202 = scmp.eq.s32.totalorder %s29, 0
      %p203 = por %p201, %p202
      %s205 = sadd.s32 %s204, 1
      %p208 = scmp.eq.s32.totalorder %s23, 1
      %p209 = scmp.ne.s32.totalorder %s204, %s206
      %p210 = scmp.eq.s32.totalorder %s23, 0
      %p211 = por %p209, %p210
      %p212 = scmp.ne.s32.totalorder %s204, %s206
      %p213 = scmp.eq.s32.totalorder %s28, 1
      %p214 = por %p212, %p213
      %p215 = scmp.ne.s32.totalorder %s206, %s207
      %p216 = scmp.eq.s32.totalorder %s28, 0
      %p217 = por %p215, %p216
      %p218 = scmp.ne.s32.totalorder %s206, %s207
      %p219 = scmp.eq.s32.totalorder %s29, 1
      %p220 = por %p218, %p219
      %p222 = scmp.ne.s32.totalorder %s207, %s221
      %p223 = scmp.eq.s32.totalorder %s29, 0
      %p224 = por %p222, %p223
      %s226 = sadd.s32 %s225, 1
      %p229 = scmp.eq.s32.totalorder %s23, 1
      %p230 = scmp.ne.s32.totalorder %s225, %s227
      %p231 = scmp.eq.s32.totalorder %s23, 0
      %p232 = por %p230, %p231
      %p233 = scmp.ne.s32.totalorder %s225, %s227
      %p234 = scmp.eq.s32.totalorder %s28, 1
      %p235 = por %p233, %p234
      %p236 = scmp.ne.s32.totalorder %s227, %s228
      %p237 = scmp.eq.s32.totalorder %s28, 0
      %p238 = por %p236, %p237
      %p239 = scmp.ne.s32.totalorder %s227, %s228
      %p240 = scmp.eq.s32.totalorder %s29, 1
      %p241 = por %p239, %p240
      %p243 = scmp.ne.s32.totalorder %s228, %s242
      %p244 = scmp.eq.s32.totalorder %s29, 0
      %p245 = por %p243, %p244
      %s247 = sadd.s32 %s246, 1
      %p250 = scmp.eq.s32.totalorder %s23, 1
      %p251 = scmp.ne.s32.totalorder %s246, %s248
      %p252 = scmp.eq.s32.totalorder %s23, 0
      %p253 = por %p251, %p252
      %p254 = scmp.ne.s32.totalorder %s246, %s248
      %p255 = scmp.eq.s32.totalorder %s28, 1
      %p256 = por %p254, %p255
      %p257 = scmp.ne.s32.totalorder %s248, %s249
      %p258 = scmp.eq.s32.totalorder %s28, 0
      %p259 = por %p257, %p258
      %p260 = scmp.ne.s32.totalorder %s248, %s249
      %p261 = scmp.eq.s32.totalorder %s29, 1
      %p262 = por %p260, %p261
      %p264 = scmp.ne.s32.totalorder %s249, %s263
      %p265 = scmp.eq.s32.totalorder %s29, 0
      %p266 = por %p264, %p265
      %s268 = sadd.s32 %s267, 1
      %p271 = scmp.eq.s32.totalorder %s23, 1
      %p272 = scmp.ne.s32.totalorder %s267, %s269
      %p273 = scmp.eq.s32.totalorder %s23, 0
      %p274 = por %p272, %p273
      %p275 = scmp.ne.s32.totalorder %s267, %s269
      %p276 = scmp.eq.s32.totalorder %s28, 1
      %p277 = por %p275, %p276
      %p278 = scmp.ne.s32.totalorder %s269, %s270
      %p279 = scmp.eq.s32.totalorder %s28, 0
      %p280 = por %p278, %p279
      %p281 = scmp.ne.s32.totalorder %s269, %s270
      %p282 = scmp.eq.s32.totalorder %s29, 1
      %p283 = por %p281, %p282
      %p285 = scmp.ne.s32.totalorder %s270, %s284
      %p286 = scmp.eq.s32.totalorder %s29, 0
      %p287 = por %p285, %p286
      %s289 = sadd.s32 %s288, 1
      %p292 = scmp.eq.s32.totalorder %s23, 1
      %p293 = scmp.ne.s32.totalorder %s288, %s290
      %p294 = scmp.eq.s32.totalorder %s23, 0
      %p295 = por %p293, %p294
      %p296 = scmp.ne.s32.totalorder %s288, %s290
      %p297 = scmp.eq.s32.totalorder %s28, 1
      %p298 = por %p296, %p297
      %p299 = scmp.ne.s32.totalorder %s290, %s291
      %p300 = scmp.eq.s32.totalorder %s28, 0
      %p301 = por %p299, %p300
      %p302 = scmp.ne.s32.totalorder %s290, %s291
      %p303 = scmp.eq.s32.totalorder %s29, 1
      %p304 = por %p302, %p303
      %p306 = scmp.ne.s32.totalorder %s291, %s305
      %p307 = scmp.eq.s32.totalorder %s29, 0
      %p308 = por %p306, %p307
      %s310 = sadd.s32 %s309, 1
      %p313 = scmp.eq.s32.totalorder %s23, 1
      %p314 = scmp.ne.s32.totalorder %s309, %s311
      %p315 = scmp.eq.s32.totalorder %s23, 0
      %p316 = por %p314, %p315
      %p317 = scmp.ne.s32.totalorder %s309, %s311
      %p318 = scmp.eq.s32.totalorder %s28, 1
      %p319 = por %p317, %p318
      %p320 = scmp.ne.s32.totalorder %s311, %s312
      %p321 = scmp.eq.s32.totalorder %s28, 0
      %p322 = por %p320, %p321
      %p323 = scmp.ne.s32.totalorder %s311, %s312
      %p324 = scmp.eq.s32.totalorder %s29, 1
      %p325 = por %p323, %p324
      %p327 = scmp.ne.s32.totalorder %s312, %s326
      %p328 = scmp.eq.s32.totalorder %s29, 0
      %p329 = por %p327, %p328
      %s330 = ssub.s32 %s23, %s30
      %p331 = scmp.eq.s32.totalorder %s330, 0
      %s333 = sadd.s32 %s332, 1
      %s334 = scalar_select %p331, %s332, %s333
      %p337 = pneg %p331
      %p338 = scmp.eq.s32.totalorder %s23, 1
      %p339 = por %p337, %p338
      %p340 = scmp.ne.s32.totalorder %s332, %s335
      %p341 = scmp.eq.s32.totalorder %s23, 0
      %p342 = por %p340, %p341
      %p343 = scmp.ne.s32.totalorder %s332, %s335
      %p344 = scmp.eq.s32.totalorder %s28, 1
      %p345 = por %p343, %p344
      %p346 = scmp.ne.s32.totalorder %s335, %s336
      %p347 = scmp.eq.s32.totalorder %s28, 0
      %p348 = por %p346, %p347
      %p349 = scmp.ne.s32.totalorder %s335, %s336
      %p350 = scmp.eq.s32.totalorder %s29, 1
      %p351 = por %p349, %p350
      %p353 = scmp.ne.s32.totalorder %s336, %s352
      %p354 = scmp.eq.s32.totalorder %s29, 0
      %p355 = por %p353, %p354
      %p356 = scmp.le.s32.totalorder 1, %s23
      %p357 = scmp.lt.s32.totalorder %s23, 3
      %p358 = pnand %p356, %p357
      %p359 = pneg %p358
      // Predicated region
      $region9: #{decoder_forward.1} parent=5 // pred_check
        _
      $region10: #{decoder_forward.1} parent=5 // pred_check_branch
        %361 = sbr.rel (%p358) target = $region12
      $region11: #{decoder_forward.1} parent=5 // pred_region
        %s362 = ssub.s32 %s23, 1
        // Predicated region
        $region13: #{decoder_forward.1} parent=11 // pred_check
          %p363 = pneg %p70
        $region14: #{decoder_forward.1} parent=11 // pred_check_branch
          %365 = sbr.rel (%p363) target = $region16
        $region15: #{decoder_forward.1} parent=11 // pred_region
          _
        $region16: #{decoder_forward.1} parent=11 // pred_fallthru
          _
        // Predicated region
        $region17: #{decoder_forward.1} parent=11 // pred_check
          %p366 = pneg %p91
        $region18: #{decoder_forward.1} parent=11 // pred_check_branch
          %368 = sbr.rel (%p366) target = $region20
        $region19: #{decoder_forward.1} parent=11 // pred_region
          _
        $region20: #{decoder_forward.1} parent=11 // pred_fallthru
          _
        // Predicated region
        $region21: #{decoder_forward.1} parent=11 // pred_check
          %p369 = pneg %p112
        $region22: #{decoder_forward.1} parent=11 // pred_check_branch
          %371 = sbr.rel (%p369) target = $region24
        $region23: #{decoder_forward.1} parent=11 // pred_region
          _
        $region24: #{decoder_forward.1} parent=11 // pred_fallthru
          _
        // Predicated region
        $region25: #{decoder_forward.1} parent=11 // pred_check
          %p372 = pneg %p133
        $region26: #{decoder_forward.1} parent=11 // pred_check_branch
          %374 = sbr.rel (%p372) target = $region28
        $region27: #{decoder_forward.1} parent=11 // pred_region
          _
        $region28: #{decoder_forward.1} parent=11 // pred_fallthru
          _
        // Predicated region
        $region29: #{decoder_forward.1} parent=11 // pred_check
          %p375 = pneg %p154
        $region30: #{decoder_forward.1} parent=11 // pred_check_branch
          %377 = sbr.rel (%p375) target = $region32
        $region31: #{decoder_forward.1} parent=11 // pred_region
          _
        $region32: #{decoder_forward.1} parent=11 // pred_fallthru
          _
        // Predicated region
        $region33: #{decoder_forward.1} parent=11 // pred_check
          %p378 = pneg %p175
        $region34: #{decoder_forward.1} parent=11 // pred_check_branch
          %380 = sbr.rel (%p378) target = $region36
        $region35: #{decoder_forward.1} parent=11 // pred_region
          _
        $region36: #{decoder_forward.1} parent=11 // pred_fallthru
          _
        // Predicated region
        $region37: #{decoder_forward.1} parent=11 // pred_check
          %p381 = pneg %p196
        $region38: #{decoder_forward.1} parent=11 // pred_check_branch
          %383 = sbr.rel (%p381) target = $region40
        $region39: #{decoder_forward.1} parent=11 // pred_region
          _
        $region40: #{decoder_forward.1} parent=11 // pred_fallthru
          _
        // Predicated region
        $region41: #{decoder_forward.1} parent=11 // pred_check
          %p384 = pneg %p217
        $region42: #{decoder_forward.1} parent=11 // pred_check_branch
          %386 = sbr.rel (%p384) target = $region44
        $region43: #{decoder_forward.1} parent=11 // pred_region
          _
        $region44: #{decoder_forward.1} parent=11 // pred_fallthru
          _
        // Predicated region
        $region45: #{decoder_forward.1} parent=11 // pred_check
          %p387 = pneg %p238
        $region46: #{decoder_forward.1} parent=11 // pred_check_branch
          %389 = sbr.rel (%p387) target = $region48
        $region47: #{decoder_forward.1} parent=11 // pred_region
          _
        $region48: #{decoder_forward.1} parent=11 // pred_fallthru
          _
        // Predicated region
        $region49: #{decoder_forward.1} parent=11 // pred_check
          %p390 = pneg %p259
        $region50: #{decoder_forward.1} parent=11 // pred_check_branch
          %392 = sbr.rel (%p390) target = $region52
        $region51: #{decoder_forward.1} parent=11 // pred_region
          _
        $region52: #{decoder_forward.1} parent=11 // pred_fallthru
          _
        // Predicated region
        $region53: #{decoder_forward.1} parent=11 // pred_check
          %p393 = pneg %p280
        $region54: #{decoder_forward.1} parent=11 // pred_check_branch
          %395 = sbr.rel (%p393) target = $region56
        $region55: #{decoder_forward.1} parent=11 // pred_region
          _
        $region56: #{decoder_forward.1} parent=11 // pred_fallthru
          _
        // Predicated region
        $region57: #{decoder_forward.1} parent=11 // pred_check
          %p396 = pneg %p301
        $region58: #{decoder_forward.1} parent=11 // pred_check_branch
          %398 = sbr.rel (%p396) target = $region60
        $region59: #{decoder_forward.1} parent=11 // pred_region
          _
        $region60: #{decoder_forward.1} parent=11 // pred_fallthru
          _
        // Predicated region
        $region61: #{decoder_forward.1} parent=11 // pred_check
          %p399 = pneg %p322
        $region62: #{decoder_forward.1} parent=11 // pred_check_branch
          %401 = sbr.rel (%p399) target = $region64
        $region63: #{decoder_forward.1} parent=11 // pred_region
          _
        $region64: #{decoder_forward.1} parent=11 // pred_fallthru
          _
      $region12: #{decoder_forward.1} parent=5 // pred_fallthru
        _
      %p402 = scmp.lt.s32.totalorder %s23, 2
      // Predicated region
      $region65: #{decoder_forward.1} parent=5 // pred_check
        %p403 = pneg %p402
      $region66: #{decoder_forward.1} parent=5 // pred_check_branch
        %405 = sbr.rel (%p403) target = $region68
      $region67: #{decoder_forward.1} parent=5 // pred_region
        // Predicated region
        $region69: #{decoder_forward.1} parent=67 // pred_check
          %p406 = pneg %p43
        $region70: #{decoder_forward.1} parent=67 // pred_check_branch
          %408 = sbr.rel (%p406) target = $region72
        $region71: #{decoder_forward.1} parent=67 // pred_region
          %p409 = scmp.lt.s32.totalorder %s23, 1
          %s410 = scalar_select %p409, %s23, 1
          %s411 = smul.addr %s410, 8
          %s412 = scalar_lea.vmem %s0, %s411
        $region72: #{decoder_forward.1} parent=67 // pred_fallthru
          _
      $region68: #{decoder_forward.1} parent=5 // pred_fallthru
        _
      %p413 = scmp.le.s32.totalorder 1, %s23
      %p414 = scmp.lt.s32.totalorder %s23, 3
      %p415 = pnand %p413, %p414
      %p416 = pneg %p415
      // Predicated region
      $region73: #{decoder_forward.1} parent=5 // pred_check
        _
      $region74: #{decoder_forward.1} parent=5 // pred_check_branch
        %418 = sbr.rel (%p415) target = $region76
      $region75: #{decoder_forward.1} parent=5 // pred_region
        %s419 = ssub.s32 %s23, 1
        %p420 = scmp.lt.s32.totalorder %s28, 1
        %s421 = scalar_select %p420, %s28, 1
        %s422 = smul.addr %s421, 8
        %s423 = scalar_lea.vmem %s0, %s422
        %p424 = pneg %p49
        %p425 = pneg %p46
        %p426 = pneg %p70
        %p427 = pneg %p67
        %p428 = pneg %p91
        %p429 = pneg %p88
        %p430 = pneg %p112
        %p431 = pneg %p109
        %p432 = pneg %p133
        %p433 = pneg %p130
        %p434 = pneg %p154
        %p435 = pneg %p151
        %p436 = pneg %p175
        %p437 = pneg %p172
        %p438 = pneg %p196
        %p439 = pneg %p193
        %p440 = pneg %p217
        %p441 = pneg %p214
        %p442 = pneg %p238
        %p443 = pneg %p235
        %p444 = pneg %p259
        %p445 = pneg %p256
        %p446 = pneg %p280
        %p447 = pneg %p277
        %p448 = pneg %p301
        %p449 = pneg %p298
        %p450 = pneg %p322
        %p451 = pneg %p319
        %p452 = pneg %p348
        %p453 = pneg %p345
        %s454 = sand.u32 %s335, 1
        %s455 = scalar_lea.sflag [#allocation3], %s454
        %s456 = sand.u32 %s335, 1
        %s457 = smul.addr %s456, 8
        %s458 = scalar_lea.vmem [#allocation2], %s457
        %p459 = scmp.lt.s32.totalorder %s28, 1
        %s460 = scalar_select %p459, %s28, 1
        %s461 = smul.addr %s460, 8
        %s462 = scalar_lea.vmem %s0, %s461
        %v463 = vlaneseq
        %v464 = vshrl.u32 %v463, 7
        %vm465 = vcmp.eq.s32.totalorder %v464, 0
        %vm466 = vcmp.eq.s32.totalorder %v464, 7
        %v467 = vld [vmem:[%s462] sm:$0xff]
        %v468 = vld [vmem:[%s1] sm:$0xff]
        %v469 = vadd.f32 %v467, %v468
        %v470 = vld [vmem:[%s2] sm:$0xff]
        %v471 = vld [vmem:[%s2 + $0x8] sm:$0xff]
        %v472 = vld [vmem:[%s2 + $0x10] sm:$0xff]
        %v473 = vld [vmem:[%s2 + $0x18] sm:$0xff]
        %v474 = vld [vmem:[%s3] sm:$0x1]
        %v476 = vperm.slane %v474, 0
        %vm478 = vcmask 261120
        %v480 = vsel %vm478, %v469, 0
        %482 = vmatpush.msra.mxu0 0.0
        %483 = vmatpush.msra.mxu0 0.0
        %484 = vmatpush.msra.mxu0 0.0
        %485 = vmatpush.msra.mxu0 0.0
        %486 = vmatpush.msra.mxu0 0.0
        %487 = vmatpush.msra.mxu0 0.0
        %488 = vmatpush.msra.mxu0 0.0
        %489 = vmatpush.msra.mxu0 0.0
        %490 = vmatpush.msra.mxu0 0.0
        %491 = vmatpush.msra.mxu0 0.0
        %492 = vmatpush.msra.mxu0 0.0
        %493 = vmatpush.msra.mxu0 0.0
        %494 = vmatpush.msra.mxu0 %v473
        %495 = vmatpush.msra.mxu0 %v472
        %496 = vmatpush.msra.mxu0 %v471
        %497 = vmatpush.msra.mxu0 %v470
        %498 = vmatmul.f32.gmra.mxu0 %v480
        %v499 = vpop.f32.mrf.mxu0
        %v500 = vadd.f32 %v476, %v499
        %501 = vdwg.mxu0
        %503 = vrot.lane.b32.xlu0 %v500, 96
        %v504 = vpop.permute.xlu0 %503
        %vm505 = vcmask 64512
        %v506 = vsel %vm505, %v500, 0
        %v508 = vsel %vm505, %v504, 0
        %510 = vmatpush.xpose.msra.mxu0 0.0
        %511 = vmatpush.xpose.msra.mxu0 0.0
        %512 = vmatpush.xpose.msra.mxu0 0.0
        %513 = vmatpush.xpose.msra.mxu0 0.0
        %514 = vmatpush.xpose.msra.mxu0 0.0
        %515 = vmatpush.xpose.msra.mxu0 0.0
        %516 = vmatpush.xpose.msra.mxu0 0.0
        %517 = vmatpush.xpose.msra.mxu0 0.0
        %518 = vmatpush.xpose.msra.mxu0 0.0
        %519 = vmatpush.xpose.msra.mxu0 0.0
        %520 = vmatpush.xpose.msra.mxu0 0.0
        %521 = vmatpush.xpose.msra.mxu0 0.0
        %522 = vmatpush.xpose.msra.mxu0 0.0
        %523 = vmatpush.xpose.msra.mxu0 0.0
        %524 = vmatpush.xpose.msra.mxu0 0.0
        %525 = vmatpush.xpose.msra.mxu0 %v508
        %526 = vmatmul.f32.gmra.mxu0 %v506
        %v527 = vpop.f32.mrf.mxu0
        %v528 = vadd.f32 0.0, %v527
        %529 = vdwg.mxu0
        %v530 = vmul.f32 %v528, 0.35355338
        %v531 = vsel %vm505, %v530, -inf
        %532 = vmax.xlane.f32.xlu0 %v531
        %v533 = vpop.xlane.xlu0 %532
        %v534 = vsub.f32 %v530, %v533
        %v535 = vmul.f32 %v534, 1.442695
        %v536 = vpow.pop %v535
        %v537 = vsel %vm505, %v536, 0.0
        %538 = vadd.xlane.f32.xlu0 %v537
        %v539 = vpop.xlane.xlu0 %538
        %v540 = vrcp.pop %v539
        %v541 = vmul.f32 %v536, %v540
        %542 = vrot.lane.b32.xlu0 %v500, 64
        %v543 = vpop.permute.xlu0 %542
        %v546 = vsel %vm505, %v541, 0
        %548 = vmatpush.msra.mxu0 0.0
        %549 = vmatpush.msra.mxu0 0.0
        %550 = vmatpush.msra.mxu0 0.0
        %551 = vmatpush.msra.mxu0 0.0
        %552 = vmatpush.msra.mxu0 0.0
        %553 = vmatpush.msra.mxu0 0.0
        %554 = vmatpush.msra.mxu0 0.0
        %555 = vmatpush.msra.mxu0 0.0
        %556 = vmatpush.msra.mxu0 0.0
        %557 = vmatpush.msra.mxu0 0.0
        %558 = vmatpush.msra.mxu0 0.0
        %559 = vmatpush.msra.mxu0 0.0
        %560 = vmatpush.msra.mxu0 0.0
        %561 = vmatpush.msra.mxu0 0.0
        %562 = vmatpush.msra.mxu0 0.0
        %563 = vmatpush.msra.mxu0 %v543
        %564 = vmatmul.f32.gmra.mxu0 %v546
        %v565 = vpop.f32.mrf.mxu0
        %v566 = vadd.f32 0.0, %v565
        %567 = vdwg.mxu0
        %568 = vrot.lane.b32.xlu0 %v500, 120
        %v569 = vpop.permute.xlu0 %568
        %570 = vrot.lane.b32.xlu0 %v500, 88
        %v571 = vpop.permute.xlu0 %570
        %v572 = vsel %vm505, %v569, 0
        %v574 = vsel %vm505, %v571, 0
        %576 = vmatpush.xpose.msra.mxu0 0.0
        %577 = vmatpush.xpose.msra.mxu0 0.0
        %578 = vmatpush.xpose.msra.mxu0 0.0
        %579 = vmatpush.xpose.msra.mxu0 0.0
        %580 = vmatpush.xpose.msra.mxu0 0.0
        %581 = vmatpush.xpose.msra.mxu0 0.0
        %582 = vmatpush.xpose.msra.mxu0 0.0
        %583 = vmatpush.xpose.msra.mxu0 0.0
        %584 = vmatpush.xpose.msra.mxu0 0.0
        %585 = vmatpush.xpose.msra.mxu0 0.0
        %586 = vmatpush.xpose.msra.mxu0 0.0
        %587 = vmatpush.xpose.msra.mxu0 0.0
        %588 = vmatpush.xpose.msra.mxu0 0.0
        %589 = vmatpush.xpose.msra.mxu0 0.0
        %590 = vmatpush.xpose.msra.mxu0 0.0
        %591 = vmatpush.xpose.msra.mxu0 %v574
        %592 = vmatmul.f32.gmra.mxu0 %v572
        %v593 = vpop.f32.mrf.mxu0
        %v594 = vadd.f32 0.0, %v593
        %595 = vdwg.mxu0
        %v596 = vmul.f32 %v594, 0.35355338
        %v597 = vsel %vm505, %v596, -inf
        %598 = vmax.xlane.f32.xlu0 %v597
        %v599 = vpop.xlane.xlu0 %598
        %v600 = vsub.f32 %v596, %v599
        %v601 = vmul.f32 %v600, 1.442695
        %v602 = vpow.pop %v601
        %v603 = vsel %vm505, %v602, 0.0
        %604 = vadd.xlane.f32.xlu0 %v603
        %v605 = vpop.xlane.xlu0 %604
        %v606 = vrcp.pop %v605
        %v607 = vmul.f32 %v602, %v606
        %608 = vrot.lane.b32.xlu0 %v500, 56
        %v609 = vpop.permute.xlu0 %608
        %v612 = vsel %vm505, %v607, 0
        %614 = vmatpush.msra.mxu0 0.0
        %615 = vmatpush.msra.mxu0 0.0
        %616 = vmatpush.msra.mxu0 0.0
        %617 = vmatpush.msra.mxu0 0.0
        %618 = vmatpush.msra.mxu0 0.0
        %619 = vmatpush.msra.mxu0 0.0
        %620 = vmatpush.msra.mxu0 0.0
        %621 = vmatpush.msra.mxu0 0.0
        %622 = vmatpush.msra.mxu0 0.0
        %623 = vmatpush.msra.mxu0 0.0
        %624 = vmatpush.msra.mxu0 0.0
        %625 = vmatpush.msra.mxu0 0.0
        %626 = vmatpush.msra.mxu0 0.0
        %627 = vmatpush.msra.mxu0 0.0
        %628 = vmatpush.msra.mxu0 0.0
        %629 = vmatpush.msra.mxu0 %v609
        %630 = vmatmul.f32.gmra.mxu0 %v612
        %v631 = vpop.f32.mrf.mxu0
        %v632 = vadd.f32 0.0, %v631
        %633 = vdwg.mxu0
        %634 = vrot.lane.b32.xlu0 %v500, 112
        %v635 = vpop.permute.xlu0 %634
        %636 = vrot.lane.b32.xlu0 %v500, 80
        %v637 = vpop.permute.xlu0 %636
        %v638 = vsel %vm505, %v635, 0
        %v640 = vsel %vm505, %v637, 0
        %642 = vmatpush.xpose.msra.mxu0 0.0
        %643 = vmatpush.xpose.msra.mxu0 0.0
        %644 = vmatpush.xpose.msra.mxu0 0.0
        %645 = vmatpush.xpose.msra.mxu0 0.0
        %646 = vmatpush.xpose.msra.mxu0 0.0
        %647 = vmatpush.xpose.msra.mxu0 0.0
        %648 = vmatpush.xpose.msra.mxu0 0.0
        %649 = vmatpush.xpose.msra.mxu0 0.0
        %650 = vmatpush.xpose.msra.mxu0 0.0
        %651 = vmatpush.xpose.msra.mxu0 0.0
        %652 = vmatpush.xpose.msra.mxu0 0.0
        %653 = vmatpush.xpose.msra.mxu0 0.0
        %654 = vmatpush.xpose.msra.mxu0 0.0
        %655 = vmatpush.xpose.msra.mxu0 0.0
        %656 = vmatpush.xpose.msra.mxu0 0.0
        %657 = vmatpush.xpose.msra.mxu0 %v640
        %658 = vmatmul.f32.gmra.mxu0 %v638
        %v659 = vpop.f32.mrf.mxu0
        %v660 = vadd.f32 0.0, %v659
        %661 = vdwg.mxu0
        %v662 = vmul.f32 %v660, 0.35355338
        %v663 = vsel %vm505, %v662, -inf
        %664 = vmax.xlane.f32.xlu0 %v663
        %v665 = vpop.xlane.xlu0 %664
        %v666 = vsub.f32 %v662, %v665
        %v667 = vmul.f32 %v666, 1.442695
        %v668 = vpow.pop %v667
        %v669 = vsel %vm505, %v668, 0.0
        %670 = vadd.xlane.f32.xlu0 %v669
        %v671 = vpop.xlane.xlu0 %670
        %v672 = vrcp.pop %v671
        %v673 = vmul.f32 %v668, %v672
        %674 = vrot.lane.b32.xlu0 %v500, 48
        %v675 = vpop.permute.xlu0 %674
        %v678 = vsel %vm505, %v673, 0
        %680 = vmatpush.msra.mxu0 0.0
        %681 = vmatpush.msra.mxu0 0.0
        %682 = vmatpush.msra.mxu0 0.0
        %683 = vmatpush.msra.mxu0 0.0
        %684 = vmatpush.msra.mxu0 0.0
        %685 = vmatpush.msra.mxu0 0.0
        %686 = vmatpush.msra.mxu0 0.0
        %687 = vmatpush.msra.mxu0 0.0
        %688 = vmatpush.msra.mxu0 0.0
        %689 = vmatpush.msra.mxu0 0.0
        %690 = vmatpush.msra.mxu0 0.0
        %691 = vmatpush.msra.mxu0 0.0
        %692 = vmatpush.msra.mxu0 0.0
        %693 = vmatpush.msra.mxu0 0.0
        %694 = vmatpush.msra.mxu0 0.0
        %695 = vmatpush.msra.mxu0 %v675
        %696 = vmatmul.f32.gmra.mxu0 %v678
        %v697 = vpop.f32.mrf.mxu0
        %v698 = vadd.f32 0.0, %v697
        %699 = vdwg.mxu0
        %700 = vrot.lane.b32.xlu0 %v500, 104
        %v701 = vpop.permute.xlu0 %700
        %702 = vrot.lane.b32.xlu0 %v500, 72
        %v703 = vpop.permute.xlu0 %702
        %v704 = vsel %vm505, %v701, 0
        %v706 = vsel %vm505, %v703, 0
        %708 = vmatpush.xpose.msra.mxu0 0.0
        %709 = vmatpush.xpose.msra.mxu0 0.0
        %710 = vmatpush.xpose.msra.mxu0 0.0
        %711 = vmatpush.xpose.msra.mxu0 0.0
        %712 = vmatpush.xpose.msra.mxu0 0.0
        %713 = vmatpush.xpose.msra.mxu0 0.0
        %714 = vmatpush.xpose.msra.mxu0 0.0
        %715 = vmatpush.xpose.msra.mxu0 0.0
        %716 = vmatpush.xpose.msra.mxu0 0.0
        %717 = vmatpush.xpose.msra.mxu0 0.0
        %718 = vmatpush.xpose.msra.mxu0 0.0
        %719 = vmatpush.xpose.msra.mxu0 0.0
        %720 = vmatpush.xpose.msra.mxu0 0.0
        %721 = vmatpush.xpose.msra.mxu0 0.0
        %722 = vmatpush.xpose.msra.mxu0 0.0
        %723 = vmatpush.xpose.msra.mxu0 %v706
        %724 = vmatmul.f32.gmra.mxu0 %v704
        %v725 = vpop.f32.mrf.mxu0
        %v726 = vadd.f32 0.0, %v725
        %727 = vdwg.mxu0
        %v728 = vmul.f32 %v726, 0.35355338
        %v729 = vsel %vm505, %v728, -inf
        %730 = vmax.xlane.f32.xlu0 %v729
        %v731 = vpop.xlane.xlu0 %730
        %v732 = vsub.f32 %v728, %v731
        %v733 = vmul.f32 %v732, 1.442695
        %v734 = vpow.pop %v733
        %v735 = vsel %vm505, %v734, 0.0
        %736 = vadd.xlane.f32.xlu0 %v735
        %v737 = vpop.xlane.xlu0 %736
        %v738 = vrcp.pop %v737
        %v739 = vmul.f32 %v734, %v738
        %740 = vrot.lane.b32.xlu0 %v500, 40
        %v741 = vpop.permute.xlu0 %740
        %v744 = vsel %vm505, %v739, 0
        %746 = vmatpush.msra.mxu0 0.0
        %747 = vmatpush.msra.mxu0 0.0
        %748 = vmatpush.msra.mxu0 0.0
        %749 = vmatpush.msra.mxu0 0.0
        %750 = vmatpush.msra.mxu0 0.0
        %751 = vmatpush.msra.mxu0 0.0
        %752 = vmatpush.msra.mxu0 0.0
        %753 = vmatpush.msra.mxu0 0.0
        %754 = vmatpush.msra.mxu0 0.0
        %755 = vmatpush.msra.mxu0 0.0
        %756 = vmatpush.msra.mxu0 0.0
        %757 = vmatpush.msra.mxu0 0.0
        %758 = vmatpush.msra.mxu0 0.0
        %759 = vmatpush.msra.mxu0 0.0
        %760 = vmatpush.msra.mxu0 0.0
        %761 = vmatpush.msra.mxu0 %v741
        %762 = vmatmul.f32.gmra.mxu0 %v744
        %v763 = vpop.f32.mrf.mxu0
        %v764 = vadd.f32 0.0, %v763
        %765 = vdwg.mxu0
        %767 = vrot.lane.b32.xlu0 %v632, 8
        %v768 = vpop.permute.xlu0 %767
        %771 = vrot.lane.b32.xlu0 %v698, 16
        %v772 = vpop.permute.xlu0 %771
        %775 = vrot.lane.b32.xlu0 %v764, 24
        %v776 = vpop.permute.xlu0 %775
        %v778 = vsel %vm505, %v566, %v768
        %vm779 = vcmask 130048
        %v780 = vsel %vm779, %v778, %v772
        %vm781 = vcmask 195584
        %v782 = vsel %vm781, %v780, %v776
        %v783 = vld [vmem:[%s4] sm:$0xff]
        %v784 = vld [vmem:[%s4 + $0x8] sm:$0xff]
        %v785 = vld [vmem:[%s4 + $0x10] sm:$0xff]
        %v786 = vld [vmem:[%s4 + $0x18] sm:$0xff]
        %v787 = vld [vmem:[%s5] sm:$0x1]
        %v789 = vperm.slane %v787, 0
        %v792 = vsel %vm478, %v782, 0
        %794 = vmatpush.msra.mxu0 0.0
        %795 = vmatpush.msra.mxu0 0.0
        %796 = vmatpush.msra.mxu0 0.0
        %797 = vmatpush.msra.mxu0 0.0
        %798 = vmatpush.msra.mxu0 0.0
        %799 = vmatpush.msra.mxu0 0.0
        %800 = vmatpush.msra.mxu0 0.0
        %801 = vmatpush.msra.mxu0 0.0
        %802 = vmatpush.msra.mxu0 0.0
        %803 = vmatpush.msra.mxu0 0.0
        %804 = vmatpush.msra.mxu0 0.0
        %805 = vmatpush.msra.mxu0 0.0
        %806 = vmatpush.msra.mxu0 %v786
        %807 = vmatpush.msra.mxu0 %v785
        %808 = vmatpush.msra.mxu0 %v784
        %809 = vmatpush.msra.mxu0 %v783
        %810 = vmatmul.f32.gmra.mxu0 %v792
        %v811 = vpop.f32.mrf.mxu0
        %v812 = vadd.f32 %v789, %v811
        %813 = vdwg.mxu0
        %v814 = vadd.f32 %v812, %v469
        %v815 = vld [vmem:[%s6] sm:$0x1]
        %v816 = vld [vmem:[%s7] sm:$0x1]
        %v817 = vsel %vm478, %v814, 0.0
        %818 = vadd.xlane.f32.xlu0 %v817
        %v819 = vpop.xlane.xlu0 %818
        %v820 = vrcp.pop 32.0
        %v821 = vmul.f32 32.0, %v820
        %v822 = vsub.f32 1.0, %v821
        %v823 = vmul.f32 %v820, %v822
        %v824 = vadd.f32 %v820, %v823
        %vm825 = vweird.f32 %v820
        %v826 = vsel %vm825, %v820, %v824
        %v827 = vmul.f32 %v819, %v826
        %v828 = vsub.f32 %v814, %v827
        %v829 = vmul.f32 %v828, %v828
        %v830 = vsel %vm478, %v829, 0.0
        %831 = vadd.xlane.f32.xlu0 %v830
        %v832 = vpop.xlane.xlu0 %831
        %v833 = vmul.f32 %v832, %v826
        %v834 = vadd.f32 %v833, 1e-05
        %v835 = vrsqrt.pop %v834
        %v836 = vmul.f32 %v835, %v834
        %v837 = vmul.f32 %v836, %v835
        %v838 = vmul.f32 0.5, %v837
        %v839 = vsub.f32 1.5, %v838
        %v840 = vmul.f32 %v835, %v839
        %vm841 = vweird.f32 %v834
        %vm842 = vweird.f32 %v835
        %vm843 = vmor %vm841, %vm842
        %v844 = vsel %vm843, %v835, %v840
        %v845 = vmul.f32 %v828, %v844
        %v847 = vperm.slane %v815, 0
        %v849 = vmul.f32 %v845, %v847
        %v851 = vperm.slane %v816, 0
        %v853 = vadd.f32 %v849, %v851
        %v854 = vrot.slane %v853, 7
        %v855 = vsel %vm465, 1, 0
        %vm856 = vcmp.eq.s32.totalorder %v855, 1
        %v857 = vsel %vm856, 0.0, %v854
        %v858 = vrot.slane %v853, 1
        %v859 = vsel %vm466, 1, 0
        %vm860 = vcmp.eq.s32.totalorder %v859, 1
        %v861 = vsel %vm860, 0.0, %v858
        %863 = vrot.lane.b32.xlu0 %v853, 32
        %v864 = vpop.permute.xlu0 %863
        %867 = vrot.lane.b32.xlu0 %v861, 64
        %v868 = vpop.permute.xlu0 %867
        %v870 = vsel %vm478, %v857, %v864
        %vm871 = vcmask 523264
        %v872 = vsel %vm871, %v870, %v868
        %v873 = vld [vmem:[%s8] sm:$0xff]
        %v874 = vld [vmem:[%s8 + $0x8] sm:$0xff]
        %v875 = vld [vmem:[%s8 + $0x10] sm:$0xff]
        %v876 = vld [vmem:[%s8 + $0x18] sm:$0xff]
        %v877 = vld [vmem:[%s8 + $0x20] sm:$0xff]
        %v878 = vld [vmem:[%s8 + $0x28] sm:$0xff]
        %v879 = vld [vmem:[%s8 + $0x30] sm:$0xff]
        %v880 = vld [vmem:[%s8 + $0x38] sm:$0xff]
        %v881 = vld [vmem:[%s8 + $0x40] sm:$0xff]
        %v882 = vld [vmem:[%s8 + $0x48] sm:$0xff]
        %v883 = vld [vmem:[%s8 + $0x50] sm:$0xff]
        %v884 = vld [vmem:[%s8 + $0x58] sm:$0xff]
        %v885 = vld [vmem:[%s9] sm:$0x1]
        %v887 = vperm.slane %v885, 0
        %vm889 = vcmask 785408
        %v891 = vsel %vm889, %v872, 0
        %893 = vmatpush.msra.mxu0 0.0
        %894 = vmatpush.msra.mxu0 0.0
        %895 = vmatpush.msra.mxu0 0.0
        %896 = vmatpush.msra.mxu0 0.0
        %897 = vmatpush.msra.mxu0 %v884
        %898 = vmatpush.msra.mxu0 %v883
        %899 = vmatpush.msra.mxu0 %v882
        %900 = vmatpush.msra.mxu0 %v881
        %901 = vmatpush.msra.mxu0 %v880
        %902 = vmatpush.msra.mxu0 %v879
        %903 = vmatpush.msra.mxu0 %v878
        %904 = vmatpush.msra.mxu0 %v877
        %905 = vmatpush.msra.mxu0 %v876
        %906 = vmatpush.msra.mxu0 %v875
        %907 = vmatpush.msra.mxu0 %v874
        %908 = vmatpush.msra.mxu0 %v873
        %909 = vmatmul.f32.gmra.mxu0 %v891
        %v910 = vpop.f32.mrf.mxu0
        %v911 = vadd.f32 %v887, %v910
        %912 = vdwg.mxu0
        %v913 = vmax.f32 %v911, 0.0
        %v914 = vrot.slane %v913, 7
        %v915 = vsel %vm856, 0.0, %v914
        %v916 = vrot.slane %v913, 1
        %v917 = vsel %vm860, 0.0, %v916
        %919 = vrot.lane.b32.xlu0 %v913, 64
        %v920 = vpop.permute.xlu0 %919
        %v922 = vsel %vm871, %v915, %v920
        %v923 = vld [vmem:[%s10] sm:$0xff]
        %v924 = vld [vmem:[%s10 + $0x8] sm:$0xff]
        %v925 = vld [vmem:[%s10 + $0x10] sm:$0xff]
        %v926 = vld [vmem:[%s10 + $0x18] sm:$0xff]
        %v927 = vld [vmem:[%s10 + $0x20] sm:$0xff]
        %v928 = vld [vmem:[%s10 + $0x28] sm:$0xff]
        %v929 = vld [vmem:[%s10 + $0x30] sm:$0xff]
        %v930 = vld [vmem:[%s10 + $0x38] sm:$0xff]
        %v931 = vld [vmem:[%s10 + $0x40] sm:$0xff]
        %v932 = vld [vmem:[%s10 + $0x48] sm:$0xff]
        %v933 = vld [vmem:[%s10 + $0x50] sm:$0xff]
        %v934 = vld [vmem:[%s10 + $0x58] sm:$0xff]
        %v935 = vld [vmem:[%s10 + $0x60] sm:$0xff]
        %v936 = vld [vmem:[%s10 + $0x68] sm:$0xff]
        %v937 = vld [vmem:[%s10 + $0x70] sm:$0xff]
        %v938 = vld [vmem:[%s10 + $0x78] sm:$0xff]
        %v939 = vld [vmem:[%s10 + $0x80] sm:$0xff]
        %v940 = vld [vmem:[%s10 + $0x88] sm:$0xff]
        %v941 = vld [vmem:[%s10 + $0x90] sm:$0xff]
        %v942 = vld [vmem:[%s10 + $0x98] sm:$0xff]
        %v943 = vld [vmem:[%s10 + $0xa0] sm:$0xff]
        %v944 = vld [vmem:[%s10 + $0xa8] sm:$0xff]
        %v945 = vld [vmem:[%s10 + $0xb0] sm:$0xff]
        %v946 = vld [vmem:[%s10 + $0xb8] sm:$0xff]
        %v947 = vld [vmem:[%s11] sm:$0x1]
        %v949 = vperm.slane %v947, 0
        %v952 = vsel %vm871, %v917, 0
        %954 = vmatpush.msra.mxu0 %v938
        %955 = vmatpush.msra.mxu0 %v937
        %956 = vmatpush.msra.mxu0 %v936
        %957 = vmatpush.msra.mxu0 %v935
        %958 = vmatpush.msra.mxu0 %v934
        %959 = vmatpush.msra.mxu0 %v933
        %960 = vmatpush.msra.mxu0 %v932
        %961 = vmatpush.msra.mxu0 %v931
        %962 = vmatpush.msra.mxu0 %v930
        %963 = vmatpush.msra.mxu0 %v929
        %964 = vmatpush.msra.mxu0 %v928
        %965 = vmatpush.msra.mxu0 %v927
        %966 = vmatpush.msra.mxu0 %v926
        %967 = vmatpush.msra.mxu0 %v925
        %968 = vmatpush.msra.mxu0 %v924
        %969 = vmatpush.msra.mxu0 %v923
        %970 = vmatmul.f32.gmra.mxu0 %v922
        %v971 = vpop.f32.mrf.mxu0
        %v972 = vadd.f32 %v949, %v971
        %973 = vdwg.mxu0
        %974 = vmatpush.msra.mxu0 0.0
        %975 = vmatpush.msra.mxu0 0.0
        %976 = vmatpush.msra.mxu0 0.0
        %977 = vmatpush.msra.mxu0 0.0
        %978 = vmatpush.msra.mxu0 0.0
        %979 = vmatpush.msra.mxu0 0.0
        %980 = vmatpush.msra.mxu0 0.0
        %981 = vmatpush.msra.mxu0 0.0
        %982 = vmatpush.msra.mxu0 %v946
        %983 = vmatpush.msra.mxu0 %v945
        %984 = vmatpush.msra.mxu0 %v944
        %985 = vmatpush.msra.mxu0 %v943
        %986 = vmatpush.msra.mxu0 %v942
        %987 = vmatpush.msra.mxu0 %v941
        %988 = vmatpush.msra.mxu0 %v940
        %989 = vmatpush.msra.mxu0 %v939
        %990 = vmatmul.f32.gmra.mxu0 %v952
        %v991 = vpop.f32.mrf.mxu0
        %v992 = vadd.f32 %v972, %v991
        %993 = vdwg.mxu0
        %v994 = vadd.f32 %v992, %v853
        %v995 = vld [vmem:[%s12] sm:$0x1]
        %v996 = vld [vmem:[%s13] sm:$0x1]
        %v997 = vsel %vm478, %v994, 0.0
        %998 = vadd.xlane.f32.xlu0 %v997
        %v999 = vpop.xlane.xlu0 %998
        %v1000 = vmul.f32 %v999, %v826
        %v1001 = vsub.f32 %v994, %v1000
        %v1002 = vmul.f32 %v1001, %v1001
        %v1003 = vsel %vm478, %v1002, 0.0
        %1004 = vadd.xlane.f32.xlu0 %v1003
        %v1005 = vpop.xlane.xlu0 %1004
        %v1006 = vmul.f32 %v1005, %v826
        %v1007 = vadd.f32 %v1006, 1e-05
        %v1008 = vrsqrt.pop %v1007
        %v1009 = vmul.f32 %v1008, %v1007
        %v1010 = vmul.f32 %v1009, %v1008
        %v1011 = vmul.f32 0.5, %v1010
        %v1012 = vsub.f32 1.5, %v1011
        %v1013 = vmul.f32 %v1008, %v1012
        %vm1014 = vweird.f32 %v1007
        %vm1015 = vweird.f32 %v1008
        %vm1016 = vmor %vm1014, %vm1015
        %v1017 = vsel %vm1016, %v1008, %v1013
        %v1018 = vmul.f32 %v1001, %v1017
        %v1020 = vperm.slane %v995, 0
        %v1022 = vmul.f32 %v1018, %v1020
        %v1024 = vperm.slane %v996, 0
        %v1026 = vadd.f32 %v1022, %v1024
        %s1027 = scalar_lea.vmem %s2, 32
        %v1028 = vld [vmem:[%s1027] sm:$0xff]
        %v1029 = vld [vmem:[%s1027 + $0x8] sm:$0xff]
        %v1030 = vld [vmem:[%s1027 + $0x10] sm:$0xff]
        %v1031 = vld [vmem:[%s1027 + $0x18] sm:$0xff]
        %s1032 = scalar_lea.vmem %s3, 1
        %v1033 = vld [vmem:[%s1032] sm:$0x1]
        %v1035 = vperm.slane %v1033, 0
        %v1038 = vsel %vm478, %v1026, 0
        %1040 = vmatpush.msra.mxu0 0.0
        %1041 = vmatpush.msra.mxu0 0.0
        %1042 = vmatpush.msra.mxu0 0.0
        %1043 = vmatpush.msra.mxu0 0.0
        %1044 = vmatpush.msra.mxu0 0.0
        %1045 = vmatpush.msra.mxu0 0.0
        %1046 = vmatpush.msra.mxu0 0.0
        %1047 = vmatpush.msra.mxu0 0.0
        %1048 = vmatpush.msra.mxu0 0.0
        %1049 = vmatpush.msra.mxu0 0.0
        %1050 = vmatpush.msra.mxu0 0.0
        %1051 = vmatpush.msra.mxu0 0.0
        %1052 = vmatpush.msra.mxu0 %v1031
        %1053 = vmatpush.msra.mxu0 %v1030
        %1054 = vmatpush.msra.mxu0 %v1029
        %1055 = vmatpush.msra.mxu0 %v1028
        %1056 = vmatmul.f32.gmra.mxu0 %v1038
        %v1057 = vpop.f32.mrf.mxu0
        %v1058 = vadd.f32 %v1035, %v1057
        %1059 = vdwg.mxu0
        %1061 = vrot.lane.b32.xlu0 %v1058, 96
        %v1062 = vpop.permute.xlu0 %1061
        %v1063 = vsel %vm505, %v1058, 0
        %v1065 = vsel %vm505, %v1062, 0
        %1067 = vmatpush.xpose.msra.mxu0 0.0
        %1068 = vmatpush.xpose.msra.mxu0 0.0
        %1069 = vmatpush.xpose.msra.mxu0 0.0
        %1070 = vmatpush.xpose.msra.mxu0 0.0
        %1071 = vmatpush.xpose.msra.mxu0 0.0
        %1072 = vmatpush.xpose.msra.mxu0 0.0
        %1073 = vmatpush.xpose.msra.mxu0 0.0
        %1074 = vmatpush.xpose.msra.mxu0 0.0
        %1075 = vmatpush.xpose.msra.mxu0 0.0
        %1076 = vmatpush.xpose.msra.mxu0 0.0
        %1077 = vmatpush.xpose.msra.mxu0 0.0
        %1078 = vmatpush.xpose.msra.mxu0 0.0
        %1079 = vmatpush.xpose.msra.mxu0 0.0
        %1080 = vmatpush.xpose.msra.mxu0 0.0
        %1081 = vmatpush.xpose.msra.mxu0 0.0
        %1082 = vmatpush.xpose.msra.mxu0 %v1065
        %1083 = vmatmul.f32.gmra.mxu0 %v1063
        %v1084 = vpop.f32.mrf.mxu0
        %v1085 = vadd.f32 0.0, %v1084
        %1086 = vdwg.mxu0
        %v1087 = vmul.f32 %v1085, 0.35355338
        %v1088 = vsel %vm505, %v1087, -inf
        %1089 = vmax.xlane.f32.xlu0 %v1088
        %v1090 = vpop.xlane.xlu0 %1089
        %v1091 = vsub.f32 %v1087, %v1090
        %v1092 = vmul.f32 %v1091, 1.442695
        %v1093 = vpow.pop %v1092
        %v1094 = vsel %vm505, %v1093, 0.0
        %1095 = vadd.xlane.f32.xlu0 %v1094
        %v1096 = vpop.xlane.xlu0 %1095
        %v1097 = vrcp.pop %v1096
        %v1098 = vmul.f32 %v1093, %v1097
        %1099 = vrot.lane.b32.xlu0 %v1058, 64
        %v1100 = vpop.permute.xlu0 %1099
        %v1103 = vsel %vm505, %v1098, 0
        %1105 = vmatpush.msra.mxu0 0.0
        %1106 = vmatpush.msra.mxu0 0.0
        %1107 = vmatpush.msra.mxu0 0.0
        %1108 = vmatpush.msra.mxu0 0.0
        %1109 = vmatpush.msra.mxu0 0.0
        %1110 = vmatpush.msra.mxu0 0.0
        %1111 = vmatpush.msra.mxu0 0.0
        %1112 = vmatpush.msra.mxu0 0.0
        %1113 = vmatpush.msra.mxu0 0.0
        %1114 = vmatpush.msra.mxu0 0.0
        %1115 = vmatpush.msra.mxu0 0.0
        %1116 = vmatpush.msra.mxu0 0.0
        %1117 = vmatpush.msra.mxu0 0.0
        %1118 = vmatpush.msra.mxu0 0.0
        %1119 = vmatpush.msra.mxu0 0.0
        %1120 = vmatpush.msra.mxu0 %v1100
        %1121 = vmatmul.f32.gmra.mxu0 %v1103
        %v1122 = vpop.f32.mrf.mxu0
        %v1123 = vadd.f32 0.0, %v1122
        %1124 = vdwg.mxu0
        %1125 = vrot.lane.b32.xlu0 %v1058, 120
        %v1126 = vpop.permute.xlu0 %1125
        %1127 = vrot.lane.b32.xlu0 %v1058, 88
        %v1128 = vpop.permute.xlu0 %1127
        %v1129 = vsel %vm505, %v1126, 0
        %v1131 = vsel %vm505, %v1128, 0
        %1133 = vmatpush.xpose.msra.mxu0 0.0
        %1134 = vmatpush.xpose.msra.mxu0 0.0
        %1135 = vmatpush.xpose.msra.mxu0 0.0
        %1136 = vmatpush.xpose.msra.mxu0 0.0
        %1137 = vmatpush.xpose.msra.mxu0 0.0
        %1138 = vmatpush.xpose.msra.mxu0 0.0
        %1139 = vmatpush.xpose.msra.mxu0 0.0
        %1140 = vmatpush.xpose.msra.mxu0 0.0
        %1141 = vmatpush.xpose.msra.mxu0 0.0
        %1142 = vmatpush.xpose.msra.mxu0 0.0
        %1143 = vmatpush.xpose.msra.mxu0 0.0
        %1144 = vmatpush.xpose.msra.mxu0 0.0
        %1145 = vmatpush.xpose.msra.mxu0 0.0
        %1146 = vmatpush.xpose.msra.mxu0 0.0
        %1147 = vmatpush.xpose.msra.mxu0 0.0
        %1148 = vmatpush.xpose.msra.mxu0 %v1131
        %1149 = vmatmul.f32.gmra.mxu0 %v1129
        %v1150 = vpop.f32.mrf.mxu0
        %v1151 = vadd.f32 0.0, %v1150
        %1152 = vdwg.mxu0
        %v1153 = vmul.f32 %v1151, 0.35355338
        %v1154 = vsel %vm505, %v1153, -inf
        %1155 = vmax.xlane.f32.xlu0 %v1154
        %v1156 = vpop.xlane.xlu0 %1155
        %v1157 = vsub.f32 %v1153, %v1156
        %v1158 = vmul.f32 %v1157, 1.442695
        %v1159 = vpow.pop %v1158
        %v1160 = vsel %vm505, %v1159, 0.0
        %1161 = vadd.xlane.f32.xlu0 %v1160
        %v1162 = vpop.xlane.xlu0 %1161
        %v1163 = vrcp.pop %v1162
        %v1164 = vmul.f32 %v1159, %v1163
        %1165 = vrot.lane.b32.xlu0 %v1058, 56
        %v1166 = vpop.permute.xlu0 %1165
        %v1169 = vsel %vm505, %v1164, 0
        %1171 = vmatpush.msra.mxu0 0.0
        %1172 = vmatpush.msra.mxu0 0.0
        %1173 = vmatpush.msra.mxu0 0.0
        %1174 = vmatpush.msra.mxu0 0.0
        %1175 = vmatpush.msra.mxu0 0.0
        %1176 = vmatpush.msra.mxu0 0.0
        %1177 = vmatpush.msra.mxu0 0.0
        %1178 = vmatpush.msra.mxu0 0.0
        %1179 = vmatpush.msra.mxu0 0.0
        %1180 = vmatpush.msra.mxu0 0.0
        %1181 = vmatpush.msra.mxu0 0.0
        %1182 = vmatpush.msra.mxu0 0.0
        %1183 = vmatpush.msra.mxu0 0.0
        %1184 = vmatpush.msra.mxu0 0.0
        %1185 = vmatpush.msra.mxu0 0.0
        %1186 = vmatpush.msra.mxu0 %v1166
        %1187 = vmatmul.f32.gmra.mxu0 %v1169
        %v1188 = vpop.f32.mrf.mxu0
        %v1189 = vadd.f32 0.0, %v1188
        %1190 = vdwg.mxu0
        %1191 = vrot.lane.b32.xlu0 %v1058, 112
        %v1192 = vpop.permute.xlu0 %1191
        %1193 = vrot.lane.b32.xlu0 %v1058, 80
        %v1194 = vpop.permute.xlu0 %1193
        %v1195 = vsel %vm505, %v1192, 0
        %v1197 = vsel %vm505, %v1194, 0
        %1199 = vmatpush.xpose.msra.mxu0 0.0
        %1200 = vmatpush.xpose.msra.mxu0 0.0
        %1201 = vmatpush.xpose.msra.mxu0 0.0
        %1202 = vmatpush.xpose.msra.mxu0 0.0
        %1203 = vmatpush.xpose.msra.mxu0 0.0
        %1204 = vmatpush.xpose.msra.mxu0 0.0
        %1205 = vmatpush.xpose.msra.mxu0 0.0
        %1206 = vmatpush.xpose.msra.mxu0 0.0
        %1207 = vmatpush.xpose.msra.mxu0 0.0
        %1208 = vmatpush.xpose.msra.mxu0 0.0
        %1209 = vmatpush.xpose.msra.mxu0 0.0
        %1210 = vmatpush.xpose.msra.mxu0 0.0
        %1211 = vmatpush.xpose.msra.mxu0 0.0
        %1212 = vmatpush.xpose.msra.mxu0 0.0
        %1213 = vmatpush.xpose.msra.mxu0 0.0
        %1214 = vmatpush.xpose.msra.mxu0 %v1197
        %1215 = vmatmul.f32.gmra.mxu0 %v1195
        %v1216 = vpop.f32.mrf.mxu0
        %v1217 = vadd.f32 0.0, %v1216
        %1218 = vdwg.mxu0
        %v1219 = vmul.f32 %v1217, 0.35355338
        %v1220 = vsel %vm505, %v1219, -inf
        %1221 = vmax.xlane.f32.xlu0 %v1220
        %v1222 = vpop.xlane.xlu0 %1221
        %v1223 = vsub.f32 %v1219, %v1222
        %v1224 = vmul.f32 %v1223, 1.442695
        %v1225 = vpow.pop %v1224
        %v1226 = vsel %vm505, %v1225, 0.0
        %1227 = vadd.xlane.f32.xlu0 %v1226
        %v1228 = vpop.xlane.xlu0 %1227
        %v1229 = vrcp.pop %v1228
        %v1230 = vmul.f32 %v1225, %v1229
        %1231 = vrot.lane.b32.xlu0 %v1058, 48
        %v1232 = vpop.permute.xlu0 %1231
        %v1235 = vsel %vm505, %v1230, 0
        %1237 = vmatpush.msra.mxu0 0.0
        %1238 = vmatpush.msra.mxu0 0.0
        %1239 = vmatpush.msra.mxu0 0.0
        %1240 = vmatpush.msra.mxu0 0.0
        %1241 = vmatpush.msra.mxu0 0.0
        %1242 = vmatpush.msra.mxu0 0.0
        %1243 = vmatpush.msra.mxu0 0.0
        %1244 = vmatpush.msra.mxu0 0.0
        %1245 = vmatpush.msra.mxu0 0.0
        %1246 = vmatpush.msra.mxu0 0.0
        %1247 = vmatpush.msra.mxu0 0.0
        %1248 = vmatpush.msra.mxu0 0.0
        %1249 = vmatpush.msra.mxu0 0.0
        %1250 = vmatpush.msra.mxu0 0.0
        %1251 = vmatpush.msra.mxu0 0.0
        %1252 = vmatpush.msra.mxu0 %v1232
        %1253 = vmatmul.f32.gmra.mxu0 %v1235
        %v1254 = vpop.f32.mrf.mxu0
        %v1255 = vadd.f32 0.0, %v1254
        %1256 = vdwg.mxu0
        %1257 = vrot.lane.b32.xlu0 %v1058, 104
        %v1258 = vpop.permute.xlu0 %1257
        %1259 = vrot.lane.b32.xlu0 %v1058, 72
        %v1260 = vpop.permute.xlu0 %1259
        %v1261 = vsel %vm505, %v1258, 0
        %v1263 = vsel %vm505, %v1260, 0
        %1265 = vmatpush.xpose.msra.mxu0 0.0
        %1266 = vmatpush.xpose.msra.mxu0 0.0
        %1267 = vmatpush.xpose.msra.mxu0 0.0
        %1268 = vmatpush.xpose.msra.mxu0 0.0
        %1269 = vmatpush.xpose.msra.mxu0 0.0
        %1270 = vmatpush.xpose.msra.mxu0 0.0
        %1271 = vmatpush.xpose.msra.mxu0 0.0
        %1272 = vmatpush.xpose.msra.mxu0 0.0
        %1273 = vmatpush.xpose.msra.mxu0 0.0
        %1274 = vmatpush.xpose.msra.mxu0 0.0
        %1275 = vmatpush.xpose.msra.mxu0 0.0
        %1276 = vmatpush.xpose.msra.mxu0 0.0
        %1277 = vmatpush.xpose.msra.mxu0 0.0
        %1278 = vmatpush.xpose.msra.mxu0 0.0
        %1279 = vmatpush.xpose.msra.mxu0 0.0
        %1280 = vmatpush.xpose.msra.mxu0 %v1263
        %1281 = vmatmul.f32.gmra.mxu0 %v1261
        %v1282 = vpop.f32.mrf.mxu0
        %v1283 = vadd.f32 0.0, %v1282
        %1284 = vdwg.mxu0
        %v1285 = vmul.f32 %v1283, 0.35355338
        %v1286 = vsel %vm505, %v1285, -inf
        %1287 = vmax.xlane.f32.xlu0 %v1286
        %v1288 = vpop.xlane.xlu0 %1287
        %v1289 = vsub.f32 %v1285, %v1288
        %v1290 = vmul.f32 %v1289, 1.442695
        %v1291 = vpow.pop %v1290
        %v1292 = vsel %vm505, %v1291, 0.0
        %1293 = vadd.xlane.f32.xlu0 %v1292
        %v1294 = vpop.xlane.xlu0 %1293
        %v1295 = vrcp.pop %v1294
        %v1296 = vmul.f32 %v1291, %v1295
        %1297 = vrot.lane.b32.xlu0 %v1058, 40
        %v1298 = vpop.permute.xlu0 %1297
        %v1301 = vsel %vm505, %v1296, 0
        %1303 = vmatpush.msra.mxu0 0.0
        %1304 = vmatpush.msra.mxu0 0.0
        %1305 = vmatpush.msra.mxu0 0.0
        %1306 = vmatpush.msra.mxu0 0.0
        %1307 = vmatpush.msra.mxu0 0.0
        %1308 = vmatpush.msra.mxu0 0.0
        %1309 = vmatpush.msra.mxu0 0.0
        %1310 = vmatpush.msra.mxu0 0.0
        %1311 = vmatpush.msra.mxu0 0.0
        %1312 = vmatpush.msra.mxu0 0.0
        %1313 = vmatpush.msra.mxu0 0.0
        %1314 = vmatpush.msra.mxu0 0.0
        %1315 = vmatpush.msra.mxu0 0.0
        %1316 = vmatpush.msra.mxu0 0.0
        %1317 = vmatpush.msra.mxu0 0.0
        %1318 = vmatpush.msra.mxu0 %v1298
        %1319 = vmatmul.f32.gmra.mxu0 %v1301
        %v1320 = vpop.f32.mrf.mxu0
        %v1321 = vadd.f32 0.0, %v1320
        %1322 = vdwg.mxu0
        %1324 = vrot.lane.b32.xlu0 %v1189, 8
        %v1325 = vpop.permute.xlu0 %1324
        %1328 = vrot.lane.b32.xlu0 %v1255, 16
        %v1329 = vpop.permute.xlu0 %1328
        %1332 = vrot.lane.b32.xlu0 %v1321, 24
        %v1333 = vpop.permute.xlu0 %1332
        %v1335 = vsel %vm505, %v1123, %v1325
        %v1336 = vsel %vm779, %v1335, %v1329
        %v1337 = vsel %vm781, %v1336, %v1333
        %s1338 = scalar_lea.vmem %s4, 32
        %v1339 = vld [vmem:[%s1338] sm:$0xff]
        %v1340 = vld [vmem:[%s1338 + $0x8] sm:$0xff]
        %v1341 = vld [vmem:[%s1338 + $0x10] sm:$0xff]
        %v1342 = vld [vmem:[%s1338 + $0x18] sm:$0xff]
        %s1343 = scalar_lea.vmem %s5, 1
        %v1344 = vld [vmem:[%s1343] sm:$0x1]
        %v1346 = vperm.slane %v1344, 0
        %v1349 = vsel %vm478, %v1337, 0
        %1351 = vmatpush.msra.mxu0 0.0
        %1352 = vmatpush.msra.mxu0 0.0
        %1353 = vmatpush.msra.mxu0 0.0
        %1354 = vmatpush.msra.mxu0 0.0
        %1355 = vmatpush.msra.mxu0 0.0
        %1356 = vmatpush.msra.mxu0 0.0
        %1357 = vmatpush.msra.mxu0 0.0
        %1358 = vmatpush.msra.mxu0 0.0
        %1359 = vmatpush.msra.mxu0 0.0
        %1360 = vmatpush.msra.mxu0 0.0
        %1361 = vmatpush.msra.mxu0 0.0
        %1362 = vmatpush.msra.mxu0 0.0
        %1363 = vmatpush.msra.mxu0 %v1342
        %1364 = vmatpush.msra.mxu0 %v1341
        %1365 = vmatpush.msra.mxu0 %v1340
        %1366 = vmatpush.msra.mxu0 %v1339
        %1367 = vmatmul.f32.gmra.mxu0 %v1349
        %v1368 = vpop.f32.mrf.mxu0
        %v1369 = vadd.f32 %v1346, %v1368
        %1370 = vdwg.mxu0
        %v1371 = vadd.f32 %v1369, %v1026
        %s1372 = scalar_lea.vmem %s6, 1
        %v1373 = vld [vmem:[%s1372] sm:$0x1]
        %s1374 = scalar_lea.vmem %s7, 1
        %v1375 = vld [vmem:[%s1374] sm:$0x1]
        %v1376 = vsel %vm478, %v1371, 0.0
        %1377 = vadd.xlane.f32.xlu0 %v1376
        %v1378 = vpop.xlane.xlu0 %1377
        %v1379 = vmul.f32 %v1378, %v826
        %v1380 = vsub.f32 %v1371, %v1379
        %v1381 = vmul.f32 %v1380, %v1380
        %v1382 = vsel %vm478, %v1381, 0.0
        %1383 = vadd.xlane.f32.xlu0 %v1382
        %v1384 = vpop.xlane.xlu0 %1383
        %v1385 = vmul.f32 %v1384, %v826
        %v1386 = vadd.f32 %v1385, 1e-05
        %v1387 = vrsqrt.pop %v1386
        %v1388 = vmul.f32 %v1387, %v1386
        %v1389 = vmul.f32 %v1388, %v1387
        %v1390 = vmul.f32 0.5, %v1389
        %v1391 = vsub.f32 1.5, %v1390
        %v1392 = vmul.f32 %v1387, %v1391
        %vm1393 = vweird.f32 %v1386
        %vm1394 = vweird.f32 %v1387
        %vm1395 = vmor %vm1393, %vm1394
        %v1396 = vsel %vm1395, %v1387, %v1392
        %v1397 = vmul.f32 %v1380, %v1396
        %v1399 = vperm.slane %v1373, 0
        %v1401 = vmul.f32 %v1397, %v1399
        %v1403 = vperm.slane %v1375, 0
        %v1405 = vadd.f32 %v1401, %v1403
        %v1406 = vrot.slane %v1405, 7
        %v1407 = vsel %vm856, 0.0, %v1406
        %v1408 = vrot.slane %v1405, 1
        %v1409 = vsel %vm860, 0.0, %v1408
        %1411 = vrot.lane.b32.xlu0 %v1405, 32
        %v1412 = vpop.permute.xlu0 %1411
        %1415 = vrot.lane.b32.xlu0 %v1409, 64
        %v1416 = vpop.permute.xlu0 %1415
        %v1418 = vsel %vm478, %v1407, %v1412
        %v1419 = vsel %vm871, %v1418, %v1416
        %s1420 = scalar_lea.vmem %s8, 96
        %v1421 = vld [vmem:[%s1420] sm:$0xff]
        %v1422 = vld [vmem:[%s1420 + $0x8] sm:$0xff]
        %v1423 = vld [vmem:[%s1420 + $0x10] sm:$0xff]
        %v1424 = vld [vmem:[%s1420 + $0x18] sm:$0xff]
        %v1425 = vld [vmem:[%s1420 + $0x20] sm:$0xff]
        %v1426 = vld [vmem:[%s1420 + $0x28] sm:$0xff]
        %v1427 = vld [vmem:[%s1420 + $0x30] sm:$0xff]
        %v1428 = vld [vmem:[%s1420 + $0x38] sm:$0xff]
        %v1429 = vld [vmem:[%s1420 + $0x40] sm:$0xff]
        %v1430 = vld [vmem:[%s1420 + $0x48] sm:$0xff]
        %v1431 = vld [vmem:[%s1420 + $0x50] sm:$0xff]
        %v1432 = vld [vmem:[%s1420 + $0x58] sm:$0xff]
        %s1433 = scalar_lea.vmem %s9, 1
        %v1434 = vld [vmem:[%s1433] sm:$0x1]
        %v1436 = vperm.slane %v1434, 0
        %v1439 = vsel %vm889, %v1419, 0
        %1441 = vmatpush.msra.mxu0 0.0
        %1442 = vmatpush.msra.mxu0 0.0
        %1443 = vmatpush.msra.mxu0 0.0
        %1444 = vmatpush.msra.mxu0 0.0
        %1445 = vmatpush.msra.mxu0 %v1432
        %1446 = vmatpush.msra.mxu0 %v1431
        %1447 = vmatpush.msra.mxu0 %v1430
        %1448 = vmatpush.msra.mxu0 %v1429
        %1449 = vmatpush.msra.mxu0 %v1428
        %1450 = vmatpush.msra.mxu0 %v1427
        %1451 = vmatpush.msra.mxu0 %v1426
        %1452 = vmatpush.msra.mxu0 %v1425
        %1453 = vmatpush.msra.mxu0 %v1424
        %1454 = vmatpush.msra.mxu0 %v1423
        %1455 = vmatpush.msra.mxu0 %v1422
        %1456 = vmatpush.msra.mxu0 %v1421
        %1457 = vmatmul.f32.gmra.mxu0 %v1439
        %v1458 = vpop.f32.mrf.mxu0
        %v1459 = vadd.f32 %v1436, %v1458
        %1460 = vdwg.mxu0
        %v1461 = vmax.f32 %v1459, 0.0
        %v1462 = vrot.slane %v1461, 7
        %v1463 = vsel %vm856, 0.0, %v1462
        %v1464 = vrot.slane %v1461, 1
        %v1465 = vsel %vm860, 0.0, %v1464
        %1467 = vrot.lane.b32.xlu0 %v1461, 64
        %v1468 = vpop.permute.xlu0 %1467
        %v1470 = vsel %vm871, %v1463, %v1468
        %s1471 = scalar_lea.vmem %s10, 192
        %v1472 = vld [vmem:[%s1471] sm:$0xff]
        %v1473 = vld [vmem:[%s1471 + $0x8] sm:$0xff]
        %v1474 = vld [vmem:[%s1471 + $0x10] sm:$0xff]
        %v1475 = vld [vmem:[%s1471 + $0x18] sm:$0xff]
        %v1476 = vld [vmem:[%s1471 + $0x20] sm:$0xff]
        %v1477 = vld [vmem:[%s1471 + $0x28] sm:$0xff]
        %v1478 = vld [vmem:[%s1471 + $0x30] sm:$0xff]
        %v1479 = vld [vmem:[%s1471 + $0x38] sm:$0xff]
        %v1480 = vld [vmem:[%s1471 + $0x40] sm:$0xff]
        %v1481 = vld [vmem:[%s1471 + $0x48] sm:$0xff]
        %v1482 = vld [vmem:[%s1471 + $0x50] sm:$0xff]
        %v1483 = vld [vmem:[%s1471 + $0x58] sm:$0xff]
        %v1484 = vld [vmem:[%s1471 + $0x60] sm:$0xff]
        %v1485 = vld [vmem:[%s1471 + $0x68] sm:$0xff]
        %v1486 = vld [vmem:[%s1471 + $0x70] sm:$0xff]
        %v1487 = vld [vmem:[%s1471 + $0x78] sm:$0xff]
        %v1488 = vld [vmem:[%s1471 + $0x80] sm:$0xff]
        %v1489 = vld [vmem:[%s1471 + $0x88] sm:$0xff]
        %v1490 = vld [vmem:[%s1471 + $0x90] sm:$0xff]
        %v1491 = vld [vmem:[%s1471 + $0x98] sm:$0xff]
        %v1492 = vld [vmem:[%s1471 + $0xa0] sm:$0xff]
        %v1493 = vld [vmem:[%s1471 + $0xa8] sm:$0xff]
        %v1494 = vld [vmem:[%s1471 + $0xb0] sm:$0xff]
        %v1495 = vld [vmem:[%s1471 + $0xb8] sm:$0xff]
        %s1496 = scalar_lea.vmem %s11, 1
        %v1497 = vld [vmem:[%s1496] sm:$0x1]
        %v1499 = vperm.slane %v1497, 0
        %v1502 = vsel %vm871, %v1465, 0
        %1504 = vmatpush.msra.mxu0 %v1487
        %1505 = vmatpush.msra.mxu0 %v1486
        %1506 = vmatpush.msra.mxu0 %v1485
        %1507 = vmatpush.msra.mxu0 %v1484
        %1508 = vmatpush.msra.mxu0 %v1483
        %1509 = vmatpush.msra.mxu0 %v1482
        %1510 = vmatpush.msra.mxu0 %v1481
        %1511 = vmatpush.msra.mxu0 %v1480
        %1512 = vmatpush.msra.mxu0 %v1479
        %1513 = vmatpush.msra.mxu0 %v1478
        %1514 = vmatpush.msra.mxu0 %v1477
        %1515 = vmatpush.msra.mxu0 %v1476
        %1516 = vmatpush.msra.mxu0 %v1475
        %1517 = vmatpush.msra.mxu0 %v1474
        %1518 = vmatpush.msra.mxu0 %v1473
        %1519 = vmatpush.msra.mxu0 %v1472
        %1520 = vmatmul.f32.gmra.mxu0 %v1470
        %v1521 = vpop.f32.mrf.mxu0
        %v1522 = vadd.f32 %v1499, %v1521
        %1523 = vdwg.mxu0
        %1524 = vmatpush.msra.mxu0 0.0
        %1525 = vmatpush.msra.mxu0 0.0
        %1526 = vmatpush.msra.mxu0 0.0
        %1527 = vmatpush.msra.mxu0 0.0
        %1528 = vmatpush.msra.mxu0 0.0
        %1529 = vmatpush.msra.mxu0 0.0
        %1530 = vmatpush.msra.mxu0 0.0
        %1531 = vmatpush.msra.mxu0 0.0
        %1532 = vmatpush.msra.mxu0 %v1495
        %1533 = vmatpush.msra.mxu0 %v1494
        %1534 = vmatpush.msra.mxu0 %v1493
        %1535 = vmatpush.msra.mxu0 %v1492
        %1536 = vmatpush.msra.mxu0 %v1491
        %1537 = vmatpush.msra.mxu0 %v1490
        %1538 = vmatpush.msra.mxu0 %v1489
        %1539 = vmatpush.msra.mxu0 %v1488
        %1540 = vmatmul.f32.gmra.mxu0 %v1502
        %v1541 = vpop.f32.mrf.mxu0
        %v1542 = vadd.f32 %v1522, %v1541
        %1543 = vdwg.mxu0
        %v1544 = vadd.f32 %v1542, %v1405
        %s1545 = scalar_lea.vmem %s12, 1
        %v1546 = vld [vmem:[%s1545] sm:$0x1]
        %s1547 = scalar_lea.vmem %s13, 1
        %v1548 = vld [vmem:[%s1547] sm:$0x1]
        %v1549 = vsel %vm478, %v1544, 0.0
        %1550 = vadd.xlane.f32.xlu0 %v1549
        %v1551 = vpop.xlane.xlu0 %1550
        %v1552 = vmul.f32 %v1551, %v826
        %v1553 = vsub.f32 %v1544, %v1552
        %v1554 = vmul.f32 %v1553, %v1553
        %v1555 = vsel %vm478, %v1554, 0.0
        %1556 = vadd.xlane.f32.xlu0 %v1555
        %v1557 = vpop.xlane.xlu0 %1556
        %v1558 = vmul.f32 %v1557, %v826
        %v1559 = vadd.f32 %v1558, 1e-05
        %v1560 = vrsqrt.pop %v1559
        %v1561 = vmul.f32 %v1560, %v1559
        %v1562 = vmul.f32 %v1561, %v1560
        %v1563 = vmul.f32 0.5, %v1562
        %v1564 = vsub.f32 1.5, %v1563
        %v1565 = vmul.f32 %v1560, %v1564
        %vm1566 = vweird.f32 %v1559
        %vm1567 = vweird.f32 %v1560
        %vm1568 = vmor %vm1566, %vm1567
        %v1569 = vsel %vm1568, %v1560, %v1565
        %v1570 = vmul.f32 %v1553, %v1569
        %v1572 = vperm.slane %v1546, 0
        %v1574 = vmul.f32 %v1570, %v1572
        %v1576 = vperm.slane %v1548, 0
        %v1578 = vadd.f32 %v1574, %v1576
        %1579 = vst.msk [vmem:[%s458] sm:$0xff] %vm478, %v1578
        %s1580 = sand.u32 %s335, 1
        %s1581 = scalar_lea.sflag [#allocation3], %s1580
        %s1582 = sand.u32 %s335, 1
        %s1583 = smul.addr %s1582, 8
        %s1584 = scalar_lea.vmem [#allocation2], %s1583
        // Predicated region
        $region77: #{decoder_forward.1} parent=75 // pred_check
          %p1585 = pneg %p345
        $region78: #{decoder_forward.1} parent=75 // pred_check_branch
          %1587 = sbr.rel (%p1585) target = $region80
        $region79: #{decoder_forward.1} parent=75 // pred_region
          %1589 = vsyncadd %s1581, 0
          %s1590 = smul.addr %s28, 8
          %s1591 = scalar_lea.hbm %s14, %s1590
          %s1593 = sshll.u32 %s1584, 4
          %s1594 = int_to_ptr.vmem [resolvable:$true] %s1593
          %s1595 = sshll.u32 %s1591, 4
          %s1596 = int_to_ptr.hbm [resolvable:$true] %s1595
          %1598 = dma.vmem_to_hbm [thread:$0]  %s1594, 128, %s1596, %s1581
        $region80: #{decoder_forward.1} parent=75 // pred_fallthru
          _
      $region76: #{decoder_forward.1} parent=5 // pred_fallthru
        _
      %p1599 = scmp.le.s32.totalorder 2, %s23
      // Predicated region
      $region81: #{decoder_forward.1} parent=5 // pred_check
        %p1600 = pneg %p1599
      $region82: #{decoder_forward.1} parent=5 // pred_check_branch
        %1602 = sbr.rel (%p1600) target = $region84
      $region83: #{decoder_forward.1} parent=5 // pred_region
        %s1603 = ssub.s32 %s23, 2
        // Predicated region
        $region85: #{decoder_forward.1} parent=83 // pred_check
          %p1604 = pneg %p351
        $region86: #{decoder_forward.1} parent=83 // pred_check_branch
          %1606 = sbr.rel (%p1604) target = $region88
        $region87: #{decoder_forward.1} parent=83 // pred_region
          %s1607 = sand.u32 %s336, 1
          %s1608 = scalar_lea.sflag [#allocation3], %s1607
          %s1609 = sand.u32 %s336, 1
          %s1610 = smul.addr %s1609, 8
          %s1611 = scalar_lea.vmem [#allocation2], %s1610
          %1613 = dma.done %s1608, 128
        $region88: #{decoder_forward.1} parent=83 // pred_fallthru
          _
      $region84: #{decoder_forward.1} parent=5 // pred_fallthru
        _
    $region6: #{decoder_forward.1} parent=1 // loop_footer
      %s27 = sadd.s32 1, %s23
    $region7: #{decoder_forward.1} parent=1 // loop_footer_branch
      %22 = sbr.rel target = $region3
    $region8: #{decoder_forward.1} parent=1 // loop_exit
      _
    %1614 = vsyncpa [#allocation3], 1
    %s1615 = scalar_lea.sflag [#allocation3], 1
    %1616 = vsyncpa %s1615, 1

</llo_original>
